<compile_context>
chip_gen: v6e
topology: v6e:2x2x1
jax: 0.10.0
libtpu: 0.0.40
codegen_flags: <defaults>
</compile_context>

<pallas_src>
import functools
import math

import jax
import jax.numpy as jnp
from jax.experimental import pallas as pl
from jax.experimental.pallas import tpu as pltpu


def _round_up(x, m):
    return ((x + m - 1) // m) * m


def _vmem_capacity_bytes():
    """Best-effort per-core VMEM capacity; conservative (v7x) fallback."""
    try:
        return int(pltpu.get_tpu_info().vmem_capacity_bytes)
    except Exception:
        return 64 * 1024 * 1024


def _mask_predicate(row, col, mask_flag, s_valid, S):
    """Single fused invalid-position predicate (causal + padded key columns)."""
    pred = None
    if mask_flag:
        pred = col > row
    if s_valid < S:
        pad = col >= s_valid
        pred = pad if pred is None else (pred | pad)
    return pred


def _softmax_scores(q_ref, kt_ref, row, col, *, scale, fold_scale, mask_flag, s_valid):
    """scores = scale * q @ k^T (masked), returned as the row-normalized series (f32)."""
    S = kt_ref.shape[2]
    if fold_scale:
        # scale folded into q (exact for f32 inputs; one (tq,E) multiply vs (tq,S)).
        q = q_ref[...] * jnp.asarray(scale, dtype=q_ref.dtype)
        scores = jnp.einsum('gle,ges->gls', q, kt_ref[...],
                            preferred_element_type=jnp.float32)
    else:
        scores = jnp.einsum('gle,ges->gls', q_ref[...], kt_ref[...],
                            preferred_element_type=jnp.float32)
        scores = scores * jnp.float32(scale)

    pred = _mask_predicate(row, col, mask_flag, s_valid, S)
    if pred is not None:
        # Assumes scale > 0 (always true for 1/sqrt(E)); -inf stays -inf either order.
        scores = jnp.where(pred[None], jnp.float32(-jnp.inf), scores)

    m = jnp.max(scores, axis=-1, keepdims=True)
    e = jnp.exp(scores - m)
    den = jnp.sum(e, axis=-1, keepdims=True)
    return e * (1.0 / den)                 # dropout p=0.0 -> identity


def _anomaly_attn_full_kernel(q_ref, kt_ref, v_ref, coef_ref, inv2s2_ref,
                              v_out_ref, series_ref, prior_ref,
                              *, scale, fold_scale, mask_flag, s_valid):
    # Blocks: q (G,tq,E), kt (G,E,S_pad), v (G,S_pad,D), coef/inv2s2 (G,tq,1)
    _, TQ, _ = q_ref.shape
    S = kt_ref.shape[2]

    row_off = pl.program_id(1) * TQ
    row = jax.lax.broadcasted_iota(jnp.int32, (TQ, S), 0) + row_off
    col = jax.lax.broadcasted_iota(jnp.int32, (TQ, S), 1)

    # --- prior first: its (G,tq,S) temporary is stored & dead before the softmax chain,
    #     cutting peak live full-plane f32 intermediates. ------------------------------
    d = (row - col).astype(jnp.float32)          # f32 before squaring (no i32 overflow)
    prior = coef_ref[...] * jnp.exp(-(d * d)[None] * inv2s2_ref[...])   # (G,tq,S)
    prior_ref[...] = prior.astype(prior_ref.dtype)

    # --- softmax(series) ---------------------------------------------------------------
    series = _softmax_scores(q_ref, kt_ref, row, col, scale=scale,
                             fold_scale=fold_scale, mask_flag=mask_flag,
                             s_valid=s_valid)
    series_ref[...] = series.astype(series_ref.dtype)

    # --- V = series @ v (bf16 MXU path when inputs are bf16) ----------------------------
    V = jnp.einsum('gls,gsd->gld', series.astype(v_ref.dtype), v_ref[...],
                   preferred_element_type=jnp.float32)
    v_out_ref[...] = V.astype(v_out_ref.dtype)


def _anomaly_attn_v_kernel(q_ref, kt_ref, v_ref, v_out_ref,
                           *, scale, fold_scale, mask_flag, s_valid):
    # output_attention=False fast path: no series/prior writes at all.
    _, TQ, _ = q_ref.shape
    S = kt_ref.shape[2]
    row_off = pl.program_id(1) * TQ
    row = jax.lax.broadcasted_iota(jnp.int32, (TQ, S), 0) + row_off
    col = jax.lax.broadcasted_iota(jnp.int32, (TQ, S), 1)

    series = _softmax_scores(q_ref, kt_ref, row, col, scale=scale,
                             fold_scale=fold_scale, mask_flag=mask_flag,
                             s_valid=s_valid)
    V = jnp.einsum('gls,gsd->gld', series.astype(v_ref.dtype), v_ref[...],
                   preferred_element_type=jnp.float32)
    v_out_ref[...] = V.astype(v_out_ref.dtype)


def anomaly_attention(queries, keys, values, sigma, *,
                      mask_flag=True, scale=None, output_attention=True,
                      attn_dtype=jnp.float32):
    """Pallas implementation of AnomalyAttention.forward (attn_mask=None path).

    attn_dtype controls the stored dtype of series/prior (math stays f32); pass
    jnp.bfloat16 to halve attention-plane HBM write bytes when tolerance allows.
    """
    B, L, H, E = queries.shape
    _, S, _, D = values.shape
    if mask_flag and L != S:
        raise ValueError("TriangularCausalMask path requires L == S")
    scale_val = float(scale) if scale is not None else 1.0 / math.sqrt(E)
    fold_scale = jnp.dtype(queries.dtype) == jnp.dtype(jnp.float32)
    BH = B * H

    # --- generation-aware tiling --------------------------------------------------------
    vmem_cap = _vmem_capacity_bytes()
    big_vmem = vmem_cap >= 96 * 1024 * 1024          # v5e / v6e (128 MiB); v7x has 64 MiB
    if big_vmem:
        slice_cap, group_cap = 4 << 20, 6 << 20      # per-slice / per-group f32 plane caps
        tq_max = 512
        vmem_limit = 64 * 1024 * 1024
    else:
        slice_cap, group_cap = 2 << 20, 2 << 20
        tq_max = 256
        vmem_limit = 32 * 1024 * 1024
    vmem_limit = min(vmem_limit, (vmem_cap * 3) // 4)

    S_pad = _round_up(S, 128)                        # lane-dense series/prior stores
    tq = min(tq_max, _round_up(L, 8))
    while tq > 8 and tq * S_pad * 4 > slice_cap:
        tq = _round_up(tq // 2, 8)
    L_pad = _round_up(L, tq)

    G = 1
    for g in (32, 16, 8, 4, 2):                      # (b,h) slices per grid step
        if BH % g == 0 and g * tq * S_pad * 4 <= group_cap:
            G = g
            break
    # Keep >= 2 head-groups on the leading (parallel) axis so both v7x TensorCores get
    # work while K/V stay resident across query tiles within each core.
    while G > 1 and BH // G < 2:
        G //= 2

    # --- layout glue: [B, L, H, *] -> [BH, ...] (+ zero padding) ------------------------
    q = jnp.transpose(queries, (0, 2, 1, 3)).reshape(BH, L, E)
    kt = jnp.transpose(keys, (0, 2, 3, 1)).reshape(BH, E, S)     # pre-transposed keys
    v = jnp.transpose(values, (0, 2, 1, 3)).reshape(BH, S, D)
    if L_pad != L:
        q = jnp.pad(q, ((0, 0), (0, L_pad - L), (0, 0)))
    if S_pad != S:
        kt = jnp.pad(kt, ((0, 0), (0, 0), (0, S_pad - S)))
        v = jnp.pad(v, ((0, 0), (0, S_pad - S), (0, 0)))

    grid = (BH // G, L_pad // tq)
    kernel_params = dict(scale=scale_val, fold_scale=fold_scale,
                         mask_flag=mask_flag, s_valid=S)

    q_spec = pl.BlockSpec((G, tq, E), lambda g, t: (g, t, 0))
    kt_spec = pl.BlockSpec((G, E, S_pad), lambda g, t: (g, 0, 0))   # resident across q-tiles
    v_spec = pl.BlockSpec((G, S_pad, D), lambda g, t: (g, 0, 0))    # resident across q-tiles
    vout_spec = pl.BlockSpec((G, tq, D), lambda g, t: (g, t, 0))
    attn_spec = pl.BlockSpec((G, tq, S_pad), lambda g, t: (g, t, 0))
    compiler_params = pltpu.CompilerParams(
        dimension_semantics=("parallel", "arbitrary"),
        vmem_limit_bytes=int(vmem_limit))

    in_bytes = (q.size * q.dtype.itemsize + kt.size * kt.dtype.itemsize
                + v.size * v.dtype.itemsize)
    flops = 2 * BH * L_pad * S_pad * (E + D)
    v_out_bytes = BH * L_pad * D * jnp.dtype(queries.dtype).itemsize

    if not output_attention:
        cost = pl.CostEstimate(flops=int(flops),
                               transcendentals=int(BH * L_pad * S_pad),
                               bytes_accessed=int(in_bytes + v_out_bytes))
        V_bh = pl.pallas_call(
            functools.partial(_anomaly_attn_v_kernel, **kernel_params),
            out_shape=jax.ShapeDtypeStruct((BH, L_pad, D), queries.dtype),
            grid=grid,
            in_specs=[q_spec, kt_spec, v_spec],
            out_specs=vout_spec,
            compiler_params=compiler_params,
            cost_estimate=cost,
        )(q, kt, v)
        V = jnp.transpose(V_bh[:, :L, :].reshape(B, H, L, D), (0, 2, 1, 3))
        return V, None

    # sigma transform hoisted to the wrapper (also reused for the broadcast sigma output).
    sig_t = jnp.transpose(sigma, (0, 2, 1)).astype(jnp.float32)       # [B, H, L]
    sig_t = jax.nn.sigmoid(sig_t * 5.0) + 1e-5
    sig_t = jnp.power(3.0, sig_t) - 1.0
    inv_s = 1.0 / sig_t
    coef = (inv_s * (1.0 / math.sqrt(2.0 * math.pi))).reshape(BH, L, 1)
    inv_2s2 = (0.5 * inv_s * inv_s).reshape(BH, L, 1)
    if L_pad != L:
        coef = jnp.pad(coef, ((0, 0), (0, L_pad - L), (0, 0)))
        inv_2s2 = jnp.pad(inv_2s2, ((0, 0), (0, L_pad - L), (0, 0)))

    attn_bytes = jnp.dtype(attn_dtype).itemsize
    cost = pl.CostEstimate(
        flops=int(flops),
        transcendentals=int(2 * BH * L_pad * S_pad),
        bytes_accessed=int(in_bytes + v_out_bytes
                           + 2 * BH * L_pad * S_pad * attn_bytes))

    out_shapes = (
        jax.ShapeDtypeStruct((BH, L_pad, D), queries.dtype),      # V
        jax.ShapeDtypeStruct((BH, L_pad, S_pad), attn_dtype),     # series
        jax.ShapeDtypeStruct((BH, L_pad, S_pad), attn_dtype),     # prior
    )
    V_bh, series_bh, prior_bh = pl.pallas_call(
        functools.partial(_anomaly_attn_full_kernel, **kernel_params),
        out_shape=out_shapes,
        grid=grid,
        in_specs=[q_spec, kt_spec, v_spec,
                  pl.BlockSpec((G, tq, 1), lambda g, t: (g, t, 0)),
                  pl.BlockSpec((G, tq, 1), lambda g, t: (g, t, 0))],
        out_specs=(vout_spec, attn_spec, attn_spec),
        compiler_params=compiler_params,
        cost_estimate=cost,
    )(q, kt, v, coef, inv_2s2)

    # --- glue back to PyTorch layouts, dropping padding ---------------------------------
    V = jnp.transpose(V_bh[:, :L, :].reshape(B, H, L, D), (0, 2, 1, 3))   # [B, L, H, D]
    series = series_bh[:, :L, :S].reshape(B, H, L, S)
    prior = prior_bh[:, :L, :S].reshape(B, H, L, S)

    # sigma output is a pure row broadcast: reconstruct lazily instead of writing a full
    # (L,S) plane per head from the kernel (cuts ~1/3 of HBM write traffic).
    sigma_out = jnp.broadcast_to(sig_t[..., None], (B, H, L, S))

    return V, series, prior, sigma_out


def _reference(queries, keys, values, sigma, *, scale=None):
    """Pure-JAX reference mirroring the PyTorch forward (mask_flag=True, attn_mask=None)."""
    B, L, H, E = queries.shape
    _, S, _, D = values.shape
    sc = scale if scale is not None else 1.0 / math.sqrt(E)
    scores = jnp.einsum('blhe,bshe->bhls', queries, keys)
    causal = jnp.triu(jnp.ones((L, L), dtype=bool), k=1)[None, None]
    scores = jnp.where(causal, -jnp.inf, scores)
    attn = sc * scores
    sig = jnp.transpose(sigma, (0, 2, 1))
    sig = jax.nn.sigmoid(sig * 5.0) + 1e-5
    sig = jnp.power(3.0, sig) - 1.0
    sig = jnp.broadcast_to(sig[..., None], (B, H, L, S))
    ii = jnp.arange(L)[:, None]
    jj = jnp.arange(S)[None, :]
    dist = jnp.abs(ii - jj).astype(jnp.float32)[None, None]
    prior = 1.0 / (math.sqrt(2.0 * math.pi) * sig) * jnp.exp(-dist ** 2 / 2.0 / sig ** 2)
    series = jax.nn.softmax(attn, axis=-1)
    V = jnp.einsum('bhls,bshd->blhd', series, values)
    return V, series, prior, sig


if __name__ == "__main__":
    # Small shapes implied by the module: win_size = L = S, heads H, head dims E = D.
    B, L, H, E = 2, 8, 4, 32
    S, D = L, E
    key = jax.random.PRNGKey(0)
    kq, kk, kv, ks = jax.random.split(key, 4)
    queries = jax.random.normal(kq, (B, L, H, E), dtype=jnp.float32)
    keys_in = jax.random.normal(kk, (B, S, H, E), dtype=jnp.float32)
    values = jax.random.normal(kv, (B, S, H, D), dtype=jnp.float32)
    sigma = jax.random.normal(ks, (B, L, H), dtype=jnp.float32)

    # Full path (output_attention=True).
    V, series, prior, sigma_out = anomaly_attention(
        queries, keys_in, values, sigma,
        mask_flag=True, scale=None, output_attention=True)
    jax.block_until_ready((V, series, prior, sigma_out))

    # Fast path (output_attention=False) — V only, no attention-plane writes.
    V_fast, none_attn = anomaly_attention(
        queries, keys_in, values, sigma,
        mask_flag=True, scale=None, output_attention=False)
    jax.block_until_ready(V_fast)

    V_ref, series_ref, prior_ref, sig_ref = _reference(queries, keys_in, values, sigma)
    assert jnp.allclose(V, V_ref, rtol=2e-5, atol=2e-5)
    assert jnp.allclose(series, series_ref, rtol=2e-5, atol=2e-5)
    assert jnp.allclose(prior, prior_ref, rtol=2e-5, atol=2e-5)
    assert jnp.allclose(sigma_out, sig_ref, rtol=2e-5, atol=2e-5)
    assert none_attn is None
    assert jnp.allclose(V_fast, V_ref, rtol=2e-5, atol=2e-5)

    print("KERNEL_OK")
</pallas_src>

<mosaic_0001>
module attributes {stable_mosaic.version = 11 : i64} {
  func.func @_anomaly_attn_full_kernel(%arg0: i32, %arg1: i32, %arg2: memref<4x8x32xf32, #tpu.memory_space<vmem>>, %arg3: memref<4x32x128xf32, #tpu.memory_space<vmem>>, %arg4: memref<4x128x32xf32, #tpu.memory_space<vmem>>, %arg5: memref<4x8x1xf32, #tpu.memory_space<vmem>>, %arg6: memref<4x8x1xf32, #tpu.memory_space<vmem>>, %arg7: memref<4x8x32xf32, #tpu.memory_space<vmem>>, %arg8: memref<4x8x128xf32, #tpu.memory_space<vmem>>, %arg9: memref<4x8x128xf32, #tpu.memory_space<vmem>>) attributes {dimension_semantics = [#tpu.dimension_semantics<parallel>, #tpu.dimension_semantics<arbitrary>], iteration_bounds = array<i64: 2, 1>, scalar_prefetch = 0 : i64, scratch_operands = 0 : i64, tpu.core_type = #tpu.core_type<tc>, window_params = [{transform_indices = @transform_0, window_bounds = array<i64: 4, 8, 32>}, {transform_indices = @transform_1, window_bounds = array<i64: 4, 32, 128>}, {transform_indices = @transform_2, window_bounds = array<i64: 4, 128, 32>}, {transform_indices = @transform_3, window_bounds = array<i64: 4, 8, 1>}, {transform_indices = @transform_4, window_bounds = array<i64: 4, 8, 1>}, {transform_indices = @transform_5, window_bounds = array<i64: 4, 8, 32>}, {transform_indices = @transform_6, window_bounds = array<i64: 4, 8, 128>}, {transform_indices = @transform_7, window_bounds = array<i64: 4, 8, 128>}]} {
    %c8_i32 = arith.constant 8 : i32
    %0 = arith.muli %arg1, %c8_i32 : i32
    %1 = tpu.iota {dimensions = array<i32: 0>} : vector<8x128xi32>
    %2 = vector.broadcast %0 : i32 to vector<8x128xi32>
    %3 = arith.addi %1, %2 : vector<8x128xi32>
    %4 = tpu.iota {dimensions = array<i32: 1>} : vector<8x128xi32>
    %5 = arith.subi %3, %4 : vector<8x128xi32>
    %6 = arith.sitofp %5 : vector<8x128xi32> to vector<8x128xf32>
    %c0 = arith.constant 0 : index
    %c0_0 = arith.constant 0 : index
    %c0_1 = arith.constant 0 : index
    %7 = vector.load %arg5[%c0, %c0_0, %c0_1] : memref<4x8x1xf32, #tpu.memory_space<vmem>>, vector<4x8x1xf32>
    %8 = arith.mulf %6, %6 : vector<8x128xf32>
    %9 = vector.shape_cast %8 : vector<8x128xf32> to vector<1x8x128xf32>
    %cst = arith.constant 0.000000e+00 : f32
    %10 = vector.broadcast %cst : f32 to vector<1x8x128xf32>
    %11 = arith.subf %10, %9 : vector<1x8x128xf32>
    %c0_2 = arith.constant 0 : index
    %c0_3 = arith.constant 0 : index
    %c0_4 = arith.constant 0 : index
    %12 = vector.load %arg6[%c0_2, %c0_3, %c0_4] : memref<4x8x1xf32, #tpu.memory_space<vmem>>, vector<4x8x1xf32>
    %13 = vector.broadcast %11 : vector<1x8x128xf32> to vector<4x8x128xf32>
    %14 = vector.broadcast %12 : vector<4x8x1xf32> to vector<4x8x128xf32>
    %15 = arith.mulf %13, %14 : vector<4x8x128xf32>
    %16 = math.exp %15 : vector<4x8x128xf32>
    %17 = vector.broadcast %7 : vector<4x8x1xf32> to vector<4x8x128xf32>
    %18 = arith.mulf %17, %16 : vector<4x8x128xf32>
    %c0_5 = arith.constant 0 : index
    %c0_6 = arith.constant 0 : index
    %c0_7 = arith.constant 0 : index
    %19 = vector.load %arg9[%c0_5, %c0_6, %c0_7] : memref<4x8x128xf32, #tpu.memory_space<vmem>>, vector<4x8x128xf32>
    tpu.vector_store %arg9[%c0_5, %c0_6, %c0_7], %18 {strides = array<i32>} : memref<4x8x128xf32, #tpu.memory_space<vmem>>, vector<4x8x128xf32>,
    %c0_8 = arith.constant 0 : index
    %c0_9 = arith.constant 0 : index
    %c0_10 = arith.constant 0 : index
    %20 = vector.load %arg2[%c0_8, %c0_9, %c0_10] : memref<4x8x32xf32, #tpu.memory_space<vmem>>, vector<4x8x32xf32>
    %cst_11 = arith.constant 0.176776692 : f32
    %21 = vector.broadcast %cst_11 : f32 to vector<4x8x32xf32>
    %22 = arith.mulf %20, %21 : vector<4x8x32xf32>
    %c0_12 = arith.constant 0 : index
    %c0_13 = arith.constant 0 : index
    %c0_14 = arith.constant 0 : index
    %23 = vector.load %arg3[%c0_12, %c0_13, %c0_14] : memref<4x32x128xf32, #tpu.memory_space<vmem>>, vector<4x32x128xf32>
    "tpu.trace_start"() <{level = 10 : i32, message = "gle,ges->gls"}> : () -> ()
    %cst_15 = arith.constant dense<0.000000e+00> : vector<4x8x128xf32>
    %24 = tpu.matmul %22, %23, %cst_15 {dimension_numbers = #tpu.dot_dimension_numbers<[2], [1], [1], [2], [0, 0, 0, 1, 1, 2], [0], [0]>} : vector<4x8x32xf32>, vector<4x32x128xf32>, vector<4x8x128xf32> -> vector<4x8x128xf32>
    "tpu.trace_stop"() : () -> ()
    %25 = arith.cmpi sgt, %4, %3 : vector<8x128xi32>
    %c8_i32_16 = arith.constant 8 : i32
    %26 = vector.broadcast %c8_i32_16 : i32 to vector<8x128xi32>
    %27 = arith.cmpi sge, %4, %26 : vector<8x128xi32>
    %28 = arith.ori %25, %27 : vector<8x128xi1>
    %29 = vector.shape_cast %28 : vector<8x128xi1> to vector<1x8x128xi1>
    %cst_17 = arith.constant 0xFF800000 : f32
    %30 = vector.shape_cast %29 : vector<1x8x128xi1> to vector<1x8x128xi1>
    %31 = vector.broadcast %30 : vector<1x8x128xi1> to vector<4x8x128xi1>
    %32 = vector.broadcast %cst_17 : f32 to vector<4x8x128xf32>
    %33 = arith.select %31, %32, %24 : vector<4x8x128xi1>, vector<4x8x128xf32>
    %cst_18 = arith.constant dense<0xFF800000> : vector<4x8xf32>
    %34 = vector.multi_reduction <maximumf>, %33, %cst_18 [2] : vector<4x8x128xf32> to vector<4x8xf32>
    %35 = vector.shape_cast %34 : vector<4x8xf32> to vector<4x8x1xf32>
    %36 = vector.broadcast %35 : vector<4x8x1xf32> to vector<4x8x128xf32>
    %37 = arith.subf %33, %36 : vector<4x8x128xf32>
    %38 = math.exp %37 : vector<4x8x128xf32>
    %cst_19 = arith.constant dense<0.000000e+00> : vector<4x8xf32>
    %39 = vector.multi_reduction <add>, %38, %cst_19 [2] : vector<4x8x128xf32> to vector<4x8xf32>
    %40 = vector.shape_cast %39 : vector<4x8xf32> to vector<4x8x1xf32>
    %cst_20 = arith.constant 1.000000e+00 : f32
    %41 = vector.broadcast %cst_20 : f32 to vector<4x8x1xf32>
    %42 = arith.divf %41, %40 : vector<4x8x1xf32>
    %43 = vector.broadcast %42 : vector<4x8x1xf32> to vector<4x8x128xf32>
    %44 = arith.mulf %38, %43 : vector<4x8x128xf32>
    %c0_21 = arith.constant 0 : index
    %c0_22 = arith.constant 0 : index
    %c0_23 = arith.constant 0 : index
    %45 = vector.load %arg8[%c0_21, %c0_22, %c0_23] : memref<4x8x128xf32, #tpu.memory_space<vmem>>, vector<4x8x128xf32>
    tpu.vector_store %arg8[%c0_21, %c0_22, %c0_23], %44 {strides = array<i32>} : memref<4x8x128xf32, #tpu.memory_space<vmem>>, vector<4x8x128xf32>,
    %c0_24 = arith.constant 0 : index
    %c0_25 = arith.constant 0 : index
    %c0_26 = arith.constant 0 : index
    %46 = vector.load %arg4[%c0_24, %c0_25, %c0_26] : memref<4x128x32xf32, #tpu.memory_space<vmem>>, vector<4x128x32xf32>
    "tpu.trace_start"() <{level = 10 : i32, message = "gls,gsd->gld"}> : () -> ()
    %cst_27 = arith.constant dense<0.000000e+00> : vector<4x8x32xf32>
    %47 = tpu.matmul %44, %46, %cst_27 {dimension_numbers = #tpu.dot_dimension_numbers<[2], [1], [1], [2], [0, 0, 0, 1, 1, 2], [0], [0]>} : vector<4x8x128xf32>, vector<4x128x32xf32>, vector<4x8x32xf32> -> vector<4x8x32xf32>
    "tpu.trace_stop"() : () -> ()
    %c0_28 = arith.constant 0 : index
    %c0_29 = arith.constant 0 : index
    %c0_30 = arith.constant 0 : index
    %48 = vector.load %arg7[%c0_28, %c0_29, %c0_30] : memref<4x8x32xf32, #tpu.memory_space<vmem>>, vector<4x8x32xf32>
    tpu.vector_store %arg7[%c0_28, %c0_29, %c0_30], %47 {strides = array<i32>} : memref<4x8x32xf32, #tpu.memory_space<vmem>>, vector<4x8x32xf32>,
    return
  }
  func.func @transform_0(%arg0: i32, %arg1: i32) -> (i32, i32, i32) {
    %c0_i32 = arith.constant 0 : i32
    %c0_i32_0 = arith.constant 0 : i32
    return %arg0, %arg1, %c0_i32 : i32, i32, i32
  }
  func.func @transform_1(%arg0: i32, %arg1: i32) -> (i32, i32, i32) {
    %c0_i32 = arith.constant 0 : i32
    %c0_i32_0 = arith.constant 0 : i32
    %c0_i32_1 = arith.constant 0 : i32
    return %arg0, %c0_i32, %c0_i32_0 : i32, i32, i32
  }
  func.func @transform_2(%arg0: i32, %arg1: i32) -> (i32, i32, i32) {
    %c0_i32 = arith.constant 0 : i32
    %c0_i32_0 = arith.constant 0 : i32
    %c0_i32_1 = arith.constant 0 : i32
    return %arg0, %c0_i32, %c0_i32_0 : i32, i32, i32
  }
  func.func @transform_3(%arg0: i32, %arg1: i32) -> (i32, i32, i32) {
    %c0_i32 = arith.constant 0 : i32
    %c0_i32_0 = arith.constant 0 : i32
    return %arg0, %arg1, %c0_i32 : i32, i32, i32
  }
  func.func @transform_4(%arg0: i32, %arg1: i32) -> (i32, i32, i32) {
    %c0_i32 = arith.constant 0 : i32
    %c0_i32_0 = arith.constant 0 : i32
    return %arg0, %arg1, %c0_i32 : i32, i32, i32
  }
  func.func @transform_5(%arg0: i32, %arg1: i32) -> (i32, i32, i32) {
    %c0_i32 = arith.constant 0 : i32
    %c0_i32_0 = arith.constant 0 : i32
    return %arg0, %arg1, %c0_i32 : i32, i32, i32
  }
  func.func @transform_6(%arg0: i32, %arg1: i32) -> (i32, i32, i32) {
    %c0_i32 = arith.constant 0 : i32
    %c0_i32_0 = arith.constant 0 : i32
    return %arg0, %arg1, %c0_i32 : i32, i32, i32
  }
  func.func @transform_7(%arg0: i32, %arg1: i32) -> (i32, i32, i32) {
    %c0_i32 = arith.constant 0 : i32
    %c0_i32_0 = arith.constant 0 : i32
    return %arg0, %arg1, %c0_i32 : i32, i32, i32
  }
}

</mosaic_0001>

<llo_original>
// kernel: tpu_custom_call.1
$region0: #{tpu_custom_call.1}
  #allocation0 [shape = 'u32[]', space=smem, size = 0x4, offset = 0x4, fixed_abs, tag = 'smem constant byte address 0x4 - core index']
  #allocation1 [shape = 'u32[144,128]{1,0:T(1,128)}', space=vmem, size = 0x12000, scoped, tag = 'internal scratch']
  %s0 = inlined_call_operand.vmem [shape: f32[8,8,32], index: 0, kind: input, shape index: {}]
  %s1 = inlined_call_operand.vmem [shape: f32[8,32,128], index: 1, kind: input, shape index: {}]
  %s2 = inlined_call_operand.vmem [shape: f32[8,128,32], index: 2, kind: input, shape index: {}]
  %s3 = inlined_call_operand.vmem [shape: f32[8,8,1], index: 3, kind: input, shape index: {}]
  %s4 = inlined_call_operand.vmem [shape: f32[8,8,1], index: 4, kind: input, shape index: {}]
  %s5 = inlined_call_operand.hbm [shape: f32[8,8,32], index: 5, kind: output, shape index: {0}]
  %s6 = inlined_call_operand.hbm [shape: f32[8,8,128], index: 6, kind: output, shape index: {1}]
  %s7 = inlined_call_operand.hbm [shape: f32[8,8,128], index: 7, kind: output, shape index: {2}]
  %8 = xla_tuple %s5, %s6, %s7
  %s9 = sld [smem:[#allocation0]]
  $region69: #{tpu_custom_call.1} parent=0
    _
  %s11 = ssub.s32 1, %s9
  %s12 = scalar_select 0, %s11, %s9
  $region1: #{tpu_custom_call.1} parent=0
    #allocation2 [shape = 'u8[32768]{0}', space=vmem, size = 0x8000, scoped, tag = 'output window, operand 0']
    #allocation3 [shape = 's32[2]{0}', space=sflag, size = 0x8, scoped, tag = 'scoped memory for tpu_custom_call.1']
    #allocation4 [shape = 'u8[32768]{0}', space=vmem, size = 0x8000, scoped, tag = 'output window, operand 1']
    #allocation5 [shape = 's32[2]{0}', space=sflag, size = 0x8, scoped, tag = 'scoped memory for tpu_custom_call.1']
    #allocation6 [shape = 'u8[32768]{0}', space=vmem, size = 0x8000, scoped, tag = 'output window, operand 2']
    %13 = vsyncpa [#allocation3], 0
    %s14 = scalar_lea.sflag [#allocation3], 1
    %15 = vsyncpa %s14, 0
    %16 = vsyncpa [#allocation5], 0
    %s17 = scalar_lea.sflag [#allocation5], 1
    %18 = vsyncpa %s17, 0
    loop: start=0, step=1, limit=4
    $region2: #{tpu_custom_call.1} parent=1 // loop_pre_header
      _
    $region3: #{tpu_custom_call.1} parent=1 // loop_header
      %s20 = sphi 0, %s24
      %p21 = scmp.ge.s32.totalorder %s20, 4
      %s27 = sphi 0, %s39
      %s28 = sphi 0, %s35
      %s29 = sphi 0, %s27
      %s30 = sphi 0, %s28
      %s31 = sphi 0, %s29
      %s32 = sphi 0, %s30
      %s44 = sphi 0, %s46
      %s47 = sphi 0, %s44
      %s48 = sphi 0, %s47
      %s64 = sphi 0, %s48
      %s70 = sphi 0, %s72
      %s73 = sphi 0, %s70
      %s74 = sphi 0, %s73
      %s90 = sphi 0, %s74
      %s96 = sphi 0, %s98
      %s99 = sphi 0, %s96
      %s100 = sphi 0, %s99
      %s116 = sphi 0, %s100
      %s124 = sphi 0, %s126
      %s127 = sphi 0, %s124
      %s128 = sphi 0, %s127
      %s144 = sphi 0, %s128
      %s152 = sphi 0, %s154
      %s155 = sphi 0, %s152
      %s156 = sphi 0, %s155
      %s172 = sphi 0, %s156
      %s180 = sphi 0, %s182
      %s183 = sphi 0, %s180
      %s184 = sphi 0, %s183
      %s200 = sphi 0, %s184
      %s208 = sphi 0, %s210
      %s211 = sphi 0, %s208
      %s212 = sphi 0, %s211
      %s228 = sphi 0, %s212
      %s236 = sphi 0, %s238
      %s239 = sphi 0, %s236
      %s240 = sphi 0, %s239
      %s256 = sphi 0, %s240
    $region4: #{tpu_custom_call.1} parent=1 // loop_header_branch
      %23 = sbr.rel (%p21) target = $region8
    $region5: #{tpu_custom_call.1} parent=1 // loop_body
      %s25 = ssub.s32 %s20, 1
      %s26 = ssub.s32 %s20, 2
      %s33 = sadd.s32 1, %s28
      %p34 = scmp.ge.s32.totalorder %s33, 1
      %s35 = scalar_select %p34, 0, %s33
      %s36 = sadd.s32 1, %s27
      %s37 = scalar_select %p34, %s36, %s27
      %p38 = scmp.ge.s32.totalorder %s37, 2
      %s39 = scalar_select %p38, 0, %s37
      %s40 = ssub.s32 %s27, %s39
      %s41 = ssub.s32 %s28, %s35
      %s42 = sor.u32 %s40, %s41
      %p43 = scmp.eq.s32.totalorder %s42, 0
      %s45 = sadd.s32 %s44, 1
      %s46 = scalar_select %p43, %s44, %s45
      %p49 = pneg %p43
      %p50 = scmp.eq.s32.totalorder %s20, 1
      %p51 = por %p49, %p50
      %p52 = scmp.ne.s32.totalorder %s44, %s47
      %p53 = scmp.eq.s32.totalorder %s20, 0
      %p54 = por %p52, %p53
      %p55 = scmp.ne.s32.totalorder %s44, %s47
      %p56 = scmp.eq.s32.totalorder %s25, 1
      %p57 = por %p55, %p56
      %p58 = scmp.ne.s32.totalorder %s47, %s48
      %p59 = scmp.eq.s32.totalorder %s25, 0
      %p60 = por %p58, %p59
      %p61 = scmp.ne.s32.totalorder %s47, %s48
      %p62 = scmp.eq.s32.totalorder %s26, 1
      %p63 = por %p61, %p62
      %p65 = scmp.ne.s32.totalorder %s48, %s64
      %p66 = scmp.eq.s32.totalorder %s26, 0
      %p67 = por %p65, %p66
      %s68 = ssub.s32 %s27, %s39
      %p69 = scmp.eq.s32.totalorder %s68, 0
      %s71 = sadd.s32 %s70, 1
      %s72 = scalar_select %p69, %s70, %s71
      %p75 = pneg %p69
      %p76 = scmp.eq.s32.totalorder %s20, 1
      %p77 = por %p75, %p76
      %p78 = scmp.ne.s32.totalorder %s70, %s73
      %p79 = scmp.eq.s32.totalorder %s20, 0
      %p80 = por %p78, %p79
      %p81 = scmp.ne.s32.totalorder %s70, %s73
      %p82 = scmp.eq.s32.totalorder %s25, 1
      %p83 = por %p81, %p82
      %p84 = scmp.ne.s32.totalorder %s73, %s74
      %p85 = scmp.eq.s32.totalorder %s25, 0
      %p86 = por %p84, %p85
      %p87 = scmp.ne.s32.totalorder %s73, %s74
      %p88 = scmp.eq.s32.totalorder %s26, 1
      %p89 = por %p87, %p88
      %p91 = scmp.ne.s32.totalorder %s74, %s90
      %p92 = scmp.eq.s32.totalorder %s26, 0
      %p93 = por %p91, %p92
      %s94 = ssub.s32 %s27, %s39
      %p95 = scmp.eq.s32.totalorder %s94, 0
      %s97 = sadd.s32 %s96, 1
      %s98 = scalar_select %p95, %s96, %s97
      %p101 = pneg %p95
      %p102 = scmp.eq.s32.totalorder %s20, 1
      %p103 = por %p101, %p102
      %p104 = scmp.ne.s32.totalorder %s96, %s99
      %p105 = scmp.eq.s32.totalorder %s20, 0
      %p106 = por %p104, %p105
      %p107 = scmp.ne.s32.totalorder %s96, %s99
      %p108 = scmp.eq.s32.totalorder %s25, 1
      %p109 = por %p107, %p108
      %p110 = scmp.ne.s32.totalorder %s99, %s100
      %p111 = scmp.eq.s32.totalorder %s25, 0
      %p112 = por %p110, %p111
      %p113 = scmp.ne.s32.totalorder %s99, %s100
      %p114 = scmp.eq.s32.totalorder %s26, 1
      %p115 = por %p113, %p114
      %p117 = scmp.ne.s32.totalorder %s100, %s116
      %p118 = scmp.eq.s32.totalorder %s26, 0
      %p119 = por %p117, %p118
      %s120 = ssub.s32 %s27, %s39
      %s121 = ssub.s32 %s28, %s35
      %s122 = sor.u32 %s120, %s121
      %p123 = scmp.eq.s32.totalorder %s122, 0
      %s125 = sadd.s32 %s124, 1
      %s126 = scalar_select %p123, %s124, %s125
      %p129 = pneg %p123
      %p130 = scmp.eq.s32.totalorder %s20, 1
      %p131 = por %p129, %p130
      %p132 = scmp.ne.s32.totalorder %s124, %s127
      %p133 = scmp.eq.s32.totalorder %s20, 0
      %p134 = por %p132, %p133
      %p135 = scmp.ne.s32.totalorder %s124, %s127
      %p136 = scmp.eq.s32.totalorder %s25, 1
      %p137 = por %p135, %p136
      %p138 = scmp.ne.s32.totalorder %s127, %s128
      %p139 = scmp.eq.s32.totalorder %s25, 0
      %p140 = por %p138, %p139
      %p141 = scmp.ne.s32.totalorder %s127, %s128
      %p142 = scmp.eq.s32.totalorder %s26, 1
      %p143 = por %p141, %p142
      %p145 = scmp.ne.s32.totalorder %s128, %s144
      %p146 = scmp.eq.s32.totalorder %s26, 0
      %p147 = por %p145, %p146
      %s148 = ssub.s32 %s27, %s39
      %s149 = ssub.s32 %s28, %s35
      %s150 = sor.u32 %s148, %s149
      %p151 = scmp.eq.s32.totalorder %s150, 0
      %s153 = sadd.s32 %s152, 1
      %s154 = scalar_select %p151, %s152, %s153
      %p157 = pneg %p151
      %p158 = scmp.eq.s32.totalorder %s20, 1
      %p159 = por %p157, %p158
      %p160 = scmp.ne.s32.totalorder %s152, %s155
      %p161 = scmp.eq.s32.totalorder %s20, 0
      %p162 = por %p160, %p161
      %p163 = scmp.ne.s32.totalorder %s152, %s155
      %p164 = scmp.eq.s32.totalorder %s25, 1
      %p165 = por %p163, %p164
      %p166 = scmp.ne.s32.totalorder %s155, %s156
      %p167 = scmp.eq.s32.totalorder %s25, 0
      %p168 = por %p166, %p167
      %p169 = scmp.ne.s32.totalorder %s155, %s156
      %p170 = scmp.eq.s32.totalorder %s26, 1
      %p171 = por %p169, %p170
      %p173 = scmp.ne.s32.totalorder %s156, %s172
      %p174 = scmp.eq.s32.totalorder %s26, 0
      %p175 = por %p173, %p174
      %s176 = ssub.s32 %s27, %s39
      %s177 = ssub.s32 %s28, %s35
      %s178 = sor.u32 %s176, %s177
      %p179 = scmp.eq.s32.totalorder %s178, 0
      %s181 = sadd.s32 %s180, 1
      %s182 = scalar_select %p179, %s180, %s181
      %p185 = pneg %p179
      %p186 = scmp.eq.s32.totalorder %s20, 1
      %p187 = por %p185, %p186
      %p188 = scmp.ne.s32.totalorder %s180, %s183
      %p189 = scmp.eq.s32.totalorder %s20, 0
      %p190 = por %p188, %p189
      %p191 = scmp.ne.s32.totalorder %s180, %s183
      %p192 = scmp.eq.s32.totalorder %s25, 1
      %p193 = por %p191, %p192
      %p194 = scmp.ne.s32.totalorder %s183, %s184
      %p195 = scmp.eq.s32.totalorder %s25, 0
      %p196 = por %p194, %p195
      %p197 = scmp.ne.s32.totalorder %s183, %s184
      %p198 = scmp.eq.s32.totalorder %s26, 1
      %p199 = por %p197, %p198
      %p201 = scmp.ne.s32.totalorder %s184, %s200
      %p202 = scmp.eq.s32.totalorder %s26, 0
      %p203 = por %p201, %p202
      %s204 = ssub.s32 %s27, %s39
      %s205 = ssub.s32 %s28, %s35
      %s206 = sor.u32 %s204, %s205
      %p207 = scmp.eq.s32.totalorder %s206, 0
      %s209 = sadd.s32 %s208, 1
      %s210 = scalar_select %p207, %s208, %s209
      %p213 = pneg %p207
      %p214 = scmp.eq.s32.totalorder %s20, 1
      %p215 = por %p213, %p214
      %p216 = scmp.ne.s32.totalorder %s208, %s211
      %p217 = scmp.eq.s32.totalorder %s20, 0
      %p218 = por %p216, %p217
      %p219 = scmp.ne.s32.totalorder %s208, %s211
      %p220 = scmp.eq.s32.totalorder %s25, 1
      %p221 = por %p219, %p220
      %p222 = scmp.ne.s32.totalorder %s211, %s212
      %p223 = scmp.eq.s32.totalorder %s25, 0
      %p224 = por %p222, %p223
      %p225 = scmp.ne.s32.totalorder %s211, %s212
      %p226 = scmp.eq.s32.totalorder %s26, 1
      %p227 = por %p225, %p226
      %p229 = scmp.ne.s32.totalorder %s212, %s228
      %p230 = scmp.eq.s32.totalorder %s26, 0
      %p231 = por %p229, %p230
      %s232 = ssub.s32 %s27, %s39
      %s233 = ssub.s32 %s28, %s35
      %s234 = sor.u32 %s232, %s233
      %p235 = scmp.eq.s32.totalorder %s234, 0
      %s237 = sadd.s32 %s236, 1
      %s238 = scalar_select %p235, %s236, %s237
      %p241 = pneg %p235
      %p242 = scmp.eq.s32.totalorder %s20, 1
      %p243 = por %p241, %p242
      %p244 = scmp.ne.s32.totalorder %s236, %s239
      %p245 = scmp.eq.s32.totalorder %s20, 0
      %p246 = por %p244, %p245
      %p247 = scmp.ne.s32.totalorder %s236, %s239
      %p248 = scmp.eq.s32.totalorder %s25, 1
      %p249 = por %p247, %p248
      %p250 = scmp.ne.s32.totalorder %s239, %s240
      %p251 = scmp.eq.s32.totalorder %s25, 0
      %p252 = por %p250, %p251
      %p253 = scmp.ne.s32.totalorder %s239, %s240
      %p254 = scmp.eq.s32.totalorder %s26, 1
      %p255 = por %p253, %p254
      %p257 = scmp.ne.s32.totalorder %s240, %s256
      %p258 = scmp.eq.s32.totalorder %s26, 0
      %p259 = por %p257, %p258
      %p260 = scmp.le.s32.totalorder 1, %s20
      %p261 = scmp.lt.s32.totalorder %s20, 3
      %p262 = pnand %p260, %p261
      %p263 = pneg %p262
      // Predicated region
      $region9: #{tpu_custom_call.1} parent=5 // pred_check
        _
      $region10: #{tpu_custom_call.1} parent=5 // pred_check_branch
        %265 = sbr.rel (%p262) target = $region12
      $region11: #{tpu_custom_call.1} parent=5 // pred_region
        %s266 = ssub.s32 %s20, 1
      $region12: #{tpu_custom_call.1} parent=5 // pred_fallthru
        _
      %p267 = scmp.lt.s32.totalorder %s20, 2
      // Predicated region
      $region13: #{tpu_custom_call.1} parent=5 // pred_check
        %p268 = pneg %p267
      $region14: #{tpu_custom_call.1} parent=5 // pred_check_branch
        %270 = sbr.rel (%p268) target = $region16
      $region15: #{tpu_custom_call.1} parent=5 // pred_region
        // Predicated region
        $region17: #{tpu_custom_call.1} parent=15 // pred_check
          %p271 = pneg %p54
        $region18: #{tpu_custom_call.1} parent=15 // pred_check_branch
          %273 = sbr.rel (%p271) target = $region20
        $region19: #{tpu_custom_call.1} parent=15 // pred_region
          %s274 = smul.u32 4, %s27
          %p275 = scmp.lt.s32.totalorder %s274, 7
          %s276 = scalar_select %p275, %s274, 7
          %p277 = scmp.lt.s32.totalorder %s28, 0
          %s278 = scalar_select %p277, %s28, 0
          %s279 = sadd.s32 %s278, %s276
          %s280 = smul.addr %s279, 8
          %s281 = scalar_lea.vmem %s0, %s280
          %s282 = smul.u32 4, %s27
        $region20: #{tpu_custom_call.1} parent=15 // pred_fallthru
          _
        // Predicated region
        $region21: #{tpu_custom_call.1} parent=15 // pred_check
          %p283 = pneg %p80
        $region22: #{tpu_custom_call.1} parent=15 // pred_check_branch
          %285 = sbr.rel (%p283) target = $region24
        $region23: #{tpu_custom_call.1} parent=15 // pred_region
          %s286 = smul.u32 4, %s27
          %p287 = scmp.lt.s32.totalorder %s286, 7
          %s288 = scalar_select %p287, %s286, 7
          %s289 = smul.addr %s288, 4
          %s290 = smul.addr %s289, 8
          %s291 = scalar_lea.vmem %s1, %s290
          %s292 = smul.u32 4, %s27
        $region24: #{tpu_custom_call.1} parent=15 // pred_fallthru
          _
        // Predicated region
        $region25: #{tpu_custom_call.1} parent=15 // pred_check
          %p293 = pneg %p106
        $region26: #{tpu_custom_call.1} parent=15 // pred_check_branch
          %295 = sbr.rel (%p293) target = $region28
        $region27: #{tpu_custom_call.1} parent=15 // pred_region
          %s296 = smul.u32 4, %s27
          %p297 = scmp.lt.s32.totalorder %s296, 7
          %s298 = scalar_select %p297, %s296, 7
          %s299 = smul.addr %s298, 16
          %s300 = smul.addr %s299, 8
          %s301 = scalar_lea.vmem %s2, %s300
          %s302 = smul.u32 4, %s27
        $region28: #{tpu_custom_call.1} parent=15 // pred_fallthru
          _
        // Predicated region
        $region29: #{tpu_custom_call.1} parent=15 // pred_check
          %p303 = pneg %p134
        $region30: #{tpu_custom_call.1} parent=15 // pred_check_branch
          %305 = sbr.rel (%p303) target = $region32
        $region31: #{tpu_custom_call.1} parent=15 // pred_region
          %s306 = smul.u32 4, %s27
          %p307 = scmp.lt.s32.totalorder %s306, 7
          %s308 = scalar_select %p307, %s306, 7
          %p309 = scmp.lt.s32.totalorder %s28, 0
          %s310 = scalar_select %p309, %s28, 0
          %s311 = sadd.s32 %s310, %s308
          %s312 = smul.addr %s311, 8
          %s313 = scalar_lea.vmem %s3, %s312
          %s314 = smul.u32 4, %s27
        $region32: #{tpu_custom_call.1} parent=15 // pred_fallthru
          _
        // Predicated region
        $region33: #{tpu_custom_call.1} parent=15 // pred_check
          %p315 = pneg %p162
        $region34: #{tpu_custom_call.1} parent=15 // pred_check_branch
          %317 = sbr.rel (%p315) target = $region36
        $region35: #{tpu_custom_call.1} parent=15 // pred_region
          %s318 = smul.u32 4, %s27
          %p319 = scmp.lt.s32.totalorder %s318, 7
          %s320 = scalar_select %p319, %s318, 7
          %p321 = scmp.lt.s32.totalorder %s28, 0
          %s322 = scalar_select %p321, %s28, 0
          %s323 = sadd.s32 %s322, %s320
          %s324 = smul.addr %s323, 8
          %s325 = scalar_lea.vmem %s4, %s324
          %s326 = smul.u32 4, %s27
        $region36: #{tpu_custom_call.1} parent=15 // pred_fallthru
          _
      $region16: #{tpu_custom_call.1} parent=5 // pred_fallthru
        _
      %p327 = scmp.le.s32.totalorder 1, %s20
      %p328 = scmp.lt.s32.totalorder %s20, 3
      %p329 = pnand %p327, %p328
      %p330 = pneg %p329
      // Predicated region
      $region37: #{tpu_custom_call.1} parent=5 // pred_check
        _
      $region38: #{tpu_custom_call.1} parent=5 // pred_check_branch
        %332 = sbr.rel (%p329) target = $region40
      $region39: #{tpu_custom_call.1} parent=5 // pred_region
        %s333 = ssub.s32 %s20, 1
        %s334 = smul.u32 4, %s29
        %p335 = scmp.lt.s32.totalorder %s334, 7
        %s336 = scalar_select %p335, %s334, 7
        %p337 = scmp.lt.s32.totalorder %s30, 0
        %s338 = scalar_select %p337, %s30, 0
        %s339 = sadd.s32 %s338, %s336
        %s340 = smul.addr %s339, 8
        %s341 = scalar_lea.vmem %s0, %s340
        %p342 = pneg %p60
        %p343 = pneg %p57
        %s344 = smul.u32 4, %s29
        %p345 = scmp.lt.s32.totalorder %s344, 7
        %s346 = scalar_select %p345, %s344, 7
        %s347 = smul.addr %s346, 4
        %s348 = smul.addr %s347, 8
        %s349 = scalar_lea.vmem %s1, %s348
        %p350 = pneg %p86
        %p351 = pneg %p83
        %s352 = smul.u32 4, %s29
        %p353 = scmp.lt.s32.totalorder %s352, 7
        %s354 = scalar_select %p353, %s352, 7
        %s355 = smul.addr %s354, 16
        %s356 = smul.addr %s355, 8
        %s357 = scalar_lea.vmem %s2, %s356
        %p358 = pneg %p112
        %p359 = pneg %p109
        %s360 = smul.u32 4, %s29
        %p361 = scmp.lt.s32.totalorder %s360, 7
        %s362 = scalar_select %p361, %s360, 7
        %p363 = scmp.lt.s32.totalorder %s30, 0
        %s364 = scalar_select %p363, %s30, 0
        %s365 = sadd.s32 %s364, %s362
        %s366 = smul.addr %s365, 8
        %s367 = scalar_lea.vmem %s3, %s366
        %p368 = pneg %p140
        %p369 = pneg %p137
        %s370 = smul.u32 4, %s29
        %p371 = scmp.lt.s32.totalorder %s370, 7
        %s372 = scalar_select %p371, %s370, 7
        %p373 = scmp.lt.s32.totalorder %s30, 0
        %s374 = scalar_select %p373, %s30, 0
        %s375 = sadd.s32 %s374, %s372
        %s376 = smul.addr %s375, 8
        %s377 = scalar_lea.vmem %s4, %s376
        %p378 = pneg %p168
        %p379 = pneg %p165
        %p380 = pneg %p196
        %p381 = pneg %p193
        %s382 = sand.u32 %s183, 1
        %s383 = scalar_lea.sflag [#allocation3], %s382
        %s384 = sand.u32 %s183, 1
        %s385 = smul.addr %s384, 32
        %s386 = scalar_lea.vmem [#allocation2], %s385
        %p387 = pneg %p224
        %p388 = pneg %p221
        %s389 = sand.u32 %s25, 1
        %s390 = scalar_lea.sflag [#allocation5], %s389
        %s391 = sand.u32 %s211, 1
        %s392 = smul.addr %s391, 32
        %s393 = scalar_lea.vmem [#allocation4], %s392
        %p394 = pneg %p252
        %p395 = pneg %p249
        %s396 = sand.u32 %s25, 1
        %s397 = scalar_lea.sflag [#allocation5], %s396
        %s398 = sand.u32 %s239, 1
        %s399 = smul.addr %s398, 32
        %s400 = scalar_lea.vmem [#allocation6], %s399
        %s401 = smul.u32 4, %s29
        %p402 = scmp.lt.s32.totalorder %s401, 7
        %s403 = scalar_select %p402, %s401, 7
        %p404 = scmp.lt.s32.totalorder %s30, 0
        %s405 = scalar_select %p404, %s30, 0
        %s406 = sadd.s32 %s405, %s403
        %s407 = smul.addr %s406, 8
        %s408 = scalar_lea.vmem %s0, %s407
        %s409 = smul.u32 4, %s29
        %s410 = smul.u32 4, %s29
        %p411 = scmp.lt.s32.totalorder %s410, 7
        %s412 = scalar_select %p411, %s410, 7
        %s413 = smul.addr %s412, 4
        %s414 = smul.addr %s413, 8
        %s415 = scalar_lea.vmem %s1, %s414
        %s416 = smul.u32 4, %s29
        %s417 = smul.u32 4, %s29
        %p418 = scmp.lt.s32.totalorder %s417, 7
        %s419 = scalar_select %p418, %s417, 7
        %s420 = smul.addr %s419, 16
        %s421 = smul.addr %s420, 8
        %s422 = scalar_lea.vmem %s2, %s421
        %s423 = smul.u32 4, %s29
        %s424 = smul.u32 4, %s29
        %p425 = scmp.lt.s32.totalorder %s424, 7
        %s426 = scalar_select %p425, %s424, 7
        %p427 = scmp.lt.s32.totalorder %s30, 0
        %s428 = scalar_select %p427, %s30, 0
        %s429 = sadd.s32 %s428, %s426
        %s430 = smul.addr %s429, 8
        %s431 = scalar_lea.vmem %s3, %s430
        %s432 = smul.u32 4, %s29
        %s433 = smul.u32 4, %s29
        %p434 = scmp.lt.s32.totalorder %s433, 7
        %s435 = scalar_select %p434, %s433, 7
        %p436 = scmp.lt.s32.totalorder %s30, 0
        %s437 = scalar_select %p436, %s30, 0
        %s438 = sadd.s32 %s437, %s435
        %s439 = smul.addr %s438, 8
        %s440 = scalar_lea.vmem %s4, %s439
        %s441 = smul.u32 4, %s29
        %s442 = smul.u32 4, %s29
        %s443 = smul.u32 4, %s29
        %s444 = smul.u32 4, %s29
        %s445 = smul.u32 %s30, 8
        %v446 = vlaneseq
        %v447 = vshrl.u32 %v446, 7
        %v448 = vstv %s445
        %v449 = vadd.s32 %v447, %v448
        %v450 = vlaneseq
        %v451 = vand.u32 %v450, 127
        %v452 = vsub.s32 %v449, %v451
        %v453 = vcvt.s32.f32 %v452
        %v454 = vld [vmem:[%s431] sm:$0xff]
        %v455 = vld [vmem:[%s431 + $0x8] sm:$0xff]
        %v456 = vld [vmem:[%s431 + $0x10] sm:$0xff]
        %v457 = vld [vmem:[%s431 + $0x18] sm:$0xff]
        %v458 = vmul.f32 %v453, %v453
        %v459 = vsub.f32 0.0, %v458
        %v460 = vld [vmem:[%s440] sm:$0xff]
        %v461 = vld [vmem:[%s440 + $0x8] sm:$0xff]
        %v462 = vld [vmem:[%s440 + $0x10] sm:$0xff]
        %v463 = vld [vmem:[%s440 + $0x18] sm:$0xff]
        %465 = vset.pattern.permute.xlu0 0
        %466 = vperm.xlu0 %465, %v460
        %v467 = vpop.permute.xlu0 %466
        %470 = vset.pattern.permute.xlu0 0
        %471 = vperm.xlu0 %470, %v461
        %v472 = vpop.permute.xlu0 %471
        %475 = vset.pattern.permute.xlu0 0
        %476 = vperm.xlu0 %475, %v462
        %v477 = vpop.permute.xlu0 %476
        %480 = vset.pattern.permute.xlu0 0
        %481 = vperm.xlu0 %480, %v463
        %v482 = vpop.permute.xlu0 %481
        %v484 = vmul.f32 %v459, %v467
        %v485 = vmul.f32 %v459, %v472
        %v486 = vmul.f32 %v459, %v477
        %v487 = vmul.f32 %v459, %v482
        %v488 = vmul.f32 %v484, 1.442695
        %v489 = vpow.pop %v488
        %v490 = vmul.f32 %v485, 1.442695
        %v491 = vpow.pop %v490
        %v492 = vmul.f32 %v486, 1.442695
        %v493 = vpow.pop %v492
        %v494 = vmul.f32 %v487, 1.442695
        %v495 = vpow.pop %v494
        %497 = vset.pattern.permute.xlu0 0
        %498 = vperm.xlu0 %497, %v454
        %v499 = vpop.permute.xlu0 %498
        %502 = vset.pattern.permute.xlu0 0
        %503 = vperm.xlu0 %502, %v455
        %v504 = vpop.permute.xlu0 %503
        %507 = vset.pattern.permute.xlu0 0
        %508 = vperm.xlu0 %507, %v456
        %v509 = vpop.permute.xlu0 %508
        %512 = vset.pattern.permute.xlu0 0
        %513 = vperm.xlu0 %512, %v457
        %v514 = vpop.permute.xlu0 %513
        %v516 = vmul.f32 %v499, %v489
        %v517 = vmul.f32 %v504, %v491
        %v518 = vmul.f32 %v509, %v493
        %v519 = vmul.f32 %v514, %v495
        %520 = vst [vmem:[%s400] sm:$0xff] %v516
        %521 = vst [vmem:[%s400 + $0x8] sm:$0xff] %v517
        %522 = vst [vmem:[%s400 + $0x10] sm:$0xff] %v518
        %523 = vst [vmem:[%s400 + $0x18] sm:$0xff] %v519
        %v524 = vld [vmem:[%s408] sm:$0xff]
        %v525 = vld [vmem:[%s408 + $0x8] sm:$0xff]
        %v526 = vld [vmem:[%s408 + $0x10] sm:$0xff]
        %v527 = vld [vmem:[%s408 + $0x18] sm:$0xff]
        %v528 = vmul.f32 %v524, 0.17677669
        %v529 = vmul.f32 %v525, 0.17677669
        %v530 = vmul.f32 %v526, 0.17677669
        %v531 = vmul.f32 %v527, 0.17677669
        %v532 = vld [vmem:[%s415] sm:$0xff]
        %v533 = vld [vmem:[%s415 + $0x8] sm:$0xff]
        %v534 = vld [vmem:[%s415 + $0x10] sm:$0xff]
        %v535 = vld [vmem:[%s415 + $0x18] sm:$0xff]
        %v536 = vld [vmem:[%s415 + $0x20] sm:$0xff]
        %v537 = vld [vmem:[%s415 + $0x28] sm:$0xff]
        %v538 = vld [vmem:[%s415 + $0x30] sm:$0xff]
        %v539 = vld [vmem:[%s415 + $0x38] sm:$0xff]
        %v540 = vld [vmem:[%s415 + $0x40] sm:$0xff]
        %v541 = vld [vmem:[%s415 + $0x48] sm:$0xff]
        %v542 = vld [vmem:[%s415 + $0x50] sm:$0xff]
        %v543 = vld [vmem:[%s415 + $0x58] sm:$0xff]
        %v544 = vld [vmem:[%s415 + $0x60] sm:$0xff]
        %v545 = vld [vmem:[%s415 + $0x68] sm:$0xff]
        %v546 = vld [vmem:[%s415 + $0x70] sm:$0xff]
        %v547 = vld [vmem:[%s415 + $0x78] sm:$0xff]
        %vm548 = vcmask 261120
        %v550 = vsel %vm548, %v528, 0
        %552 = vmatprep.subr.mxu0 0.0
        %553 = vmatpush1.msra.mxu0 0.0
        %554 = vmatprep.subr.mxu0 0.0
        %555 = vmatpush1.msra.mxu0 0.0
        %556 = vmatprep.subr.mxu0 0.0
        %557 = vmatpush1.msra.mxu0 0.0
        %558 = vmatprep.subr.mxu0 0.0
        %559 = vmatpush1.msra.mxu0 0.0
        %560 = vmatprep.subr.mxu0 0.0
        %561 = vmatpush1.msra.mxu0 0.0
        %562 = vmatprep.subr.mxu0 0.0
        %563 = vmatpush1.msra.mxu0 0.0
        %564 = vmatprep.subr.mxu0 0.0
        %565 = vmatpush1.msra.mxu0 0.0
        %566 = vmatprep.subr.mxu0 0.0
        %567 = vmatpush1.msra.mxu0 0.0
        %568 = vmatprep.subr.mxu0 0.0
        %569 = vmatpush1.msra.mxu0 0.0
        %570 = vmatprep.subr.mxu0 0.0
        %571 = vmatpush1.msra.mxu0 0.0
        %572 = vmatprep.subr.mxu0 0.0
        %573 = vmatpush1.msra.mxu0 0.0
        %574 = vmatprep.subr.mxu0 0.0
        %575 = vmatpush1.msra.mxu0 0.0
        %576 = vmatprep.subr.mxu0 0.0
        %577 = vmatpush1.msra.mxu0 %v535
        %578 = vmatprep.subr.mxu0 0.0
        %579 = vmatpush1.msra.mxu0 %v534
        %580 = vmatprep.subr.mxu0 0.0
        %581 = vmatpush1.msra.mxu0 %v533
        %582 = vmatprep.subr.mxu0 0.0
        %583 = vmatpush1.msra.mxu0 %v532
        %584 = vmatprep.subr.mxu0 0.0
        %585 = vmatpush2.msra.mxu0 0.0
        %586 = vmatprep.subr.mxu0 0.0
        %587 = vmatpush2.msra.mxu0 0.0
        %588 = vmatprep.subr.mxu0 0.0
        %589 = vmatpush2.msra.mxu0 0.0
        %590 = vmatprep.subr.mxu0 0.0
        %591 = vmatpush2.msra.mxu0 0.0
        %592 = vmatprep.subr.mxu0 0.0
        %593 = vmatpush2.msra.mxu0 0.0
        %594 = vmatprep.subr.mxu0 0.0
        %595 = vmatpush2.msra.mxu0 0.0
        %596 = vmatprep.subr.mxu0 0.0
        %597 = vmatpush2.msra.mxu0 0.0
        %598 = vmatprep.subr.mxu0 0.0
        %599 = vmatpush2.msra.mxu0 0.0
        %600 = vmatprep.subr.mxu0 0.0
        %601 = vmatpush2.msra.mxu0 0.0
        %602 = vmatprep.subr.mxu0 0.0
        %603 = vmatpush2.msra.mxu0 0.0
        %604 = vmatprep.subr.mxu0 0.0
        %605 = vmatpush2.msra.mxu0 0.0
        %606 = vmatprep.subr.mxu0 0.0
        %607 = vmatpush2.msra.mxu0 0.0
        %608 = vmatprep.subr.mxu0 0.0
        %609 = vmatpush2.msra.mxu0 0.0
        %610 = vmatprep.subr.mxu0 0.0
        %611 = vmatpush2.msra.mxu0 0.0
        %612 = vmatprep.subr.mxu0 0.0
        %613 = vmatpush2.msra.mxu0 0.0
        %614 = vmatprep.subr.mxu0 0.0
        %615 = vmatpush2.msra.mxu0 0.0
        %616 = vmatprep.mubr.f32.mxu0 0.0
        %617 = vmatmul.mubr.f32.gmra.mxu0 %v550
        %v618 = vpop.f32.mrf.mxu0
        %v619 = vadd.f32 0.0, %v618
        %v620 = vpop.f32.mrf.mxu0
        %621 = vdwg.mxu0
        %v623 = vsel %vm548, %v529, 0
        %625 = vmatprep.subr.mxu0 0.0
        %626 = vmatpush1.msra.mxu0 0.0
        %627 = vmatprep.subr.mxu0 0.0
        %628 = vmatpush1.msra.mxu0 0.0
        %629 = vmatprep.subr.mxu0 0.0
        %630 = vmatpush1.msra.mxu0 0.0
        %631 = vmatprep.subr.mxu0 0.0
        %632 = vmatpush1.msra.mxu0 0.0
        %633 = vmatprep.subr.mxu0 0.0
        %634 = vmatpush1.msra.mxu0 0.0
        %635 = vmatprep.subr.mxu0 0.0
        %636 = vmatpush1.msra.mxu0 0.0
        %637 = vmatprep.subr.mxu0 0.0
        %638 = vmatpush1.msra.mxu0 0.0
        %639 = vmatprep.subr.mxu0 0.0
        %640 = vmatpush1.msra.mxu0 0.0
        %641 = vmatprep.subr.mxu0 0.0
        %642 = vmatpush1.msra.mxu0 0.0
        %643 = vmatprep.subr.mxu0 0.0
        %644 = vmatpush1.msra.mxu0 0.0
        %645 = vmatprep.subr.mxu0 0.0
        %646 = vmatpush1.msra.mxu0 0.0
        %647 = vmatprep.subr.mxu0 0.0
        %648 = vmatpush1.msra.mxu0 0.0
        %649 = vmatprep.subr.mxu0 0.0
        %650 = vmatpush1.msra.mxu0 %v539
        %651 = vmatprep.subr.mxu0 0.0
        %652 = vmatpush1.msra.mxu0 %v538
        %653 = vmatprep.subr.mxu0 0.0
        %654 = vmatpush1.msra.mxu0 %v537
        %655 = vmatprep.subr.mxu0 0.0
        %656 = vmatpush1.msra.mxu0 %v536
        %657 = vmatprep.subr.mxu0 0.0
        %658 = vmatpush2.msra.mxu0 0.0
        %659 = vmatprep.subr.mxu0 0.0
        %660 = vmatpush2.msra.mxu0 0.0
        %661 = vmatprep.subr.mxu0 0.0
        %662 = vmatpush2.msra.mxu0 0.0
        %663 = vmatprep.subr.mxu0 0.0
        %664 = vmatpush2.msra.mxu0 0.0
        %665 = vmatprep.subr.mxu0 0.0
        %666 = vmatpush2.msra.mxu0 0.0
        %667 = vmatprep.subr.mxu0 0.0
        %668 = vmatpush2.msra.mxu0 0.0
        %669 = vmatprep.subr.mxu0 0.0
        %670 = vmatpush2.msra.mxu0 0.0
        %671 = vmatprep.subr.mxu0 0.0
        %672 = vmatpush2.msra.mxu0 0.0
        %673 = vmatprep.subr.mxu0 0.0
        %674 = vmatpush2.msra.mxu0 0.0
        %675 = vmatprep.subr.mxu0 0.0
        %676 = vmatpush2.msra.mxu0 0.0
        %677 = vmatprep.subr.mxu0 0.0
        %678 = vmatpush2.msra.mxu0 0.0
        %679 = vmatprep.subr.mxu0 0.0
        %680 = vmatpush2.msra.mxu0 0.0
        %681 = vmatprep.subr.mxu0 0.0
        %682 = vmatpush2.msra.mxu0 0.0
        %683 = vmatprep.subr.mxu0 0.0
        %684 = vmatpush2.msra.mxu0 0.0
        %685 = vmatprep.subr.mxu0 0.0
        %686 = vmatpush2.msra.mxu0 0.0
        %687 = vmatprep.subr.mxu0 0.0
        %688 = vmatpush2.msra.mxu0 0.0
        %689 = vmatprep.mubr.f32.mxu0 0.0
        %690 = vmatmul.mubr.f32.gmra.mxu0 %v623
        %v691 = vpop.f32.mrf.mxu0
        %v692 = vadd.f32 0.0, %v691
        %v693 = vpop.f32.mrf.mxu0
        %694 = vdwg.mxu0
        %v696 = vsel %vm548, %v530, 0
        %698 = vmatprep.subr.mxu0 0.0
        %699 = vmatpush1.msra.mxu0 0.0
        %700 = vmatprep.subr.mxu0 0.0
        %701 = vmatpush1.msra.mxu0 0.0
        %702 = vmatprep.subr.mxu0 0.0
        %703 = vmatpush1.msra.mxu0 0.0
        %704 = vmatprep.subr.mxu0 0.0
        %705 = vmatpush1.msra.mxu0 0.0
        %706 = vmatprep.subr.mxu0 0.0
        %707 = vmatpush1.msra.mxu0 0.0
        %708 = vmatprep.subr.mxu0 0.0
        %709 = vmatpush1.msra.mxu0 0.0
        %710 = vmatprep.subr.mxu0 0.0
        %711 = vmatpush1.msra.mxu0 0.0
        %712 = vmatprep.subr.mxu0 0.0
        %713 = vmatpush1.msra.mxu0 0.0
        %714 = vmatprep.subr.mxu0 0.0
        %715 = vmatpush1.msra.mxu0 0.0
        %716 = vmatprep.subr.mxu0 0.0
        %717 = vmatpush1.msra.mxu0 0.0
        %718 = vmatprep.subr.mxu0 0.0
        %719 = vmatpush1.msra.mxu0 0.0
        %720 = vmatprep.subr.mxu0 0.0
        %721 = vmatpush1.msra.mxu0 0.0
        %722 = vmatprep.subr.mxu0 0.0
        %723 = vmatpush1.msra.mxu0 %v543
        %724 = vmatprep.subr.mxu0 0.0
        %725 = vmatpush1.msra.mxu0 %v542
        %726 = vmatprep.subr.mxu0 0.0
        %727 = vmatpush1.msra.mxu0 %v541
        %728 = vmatprep.subr.mxu0 0.0
        %729 = vmatpush1.msra.mxu0 %v540
        %730 = vmatprep.subr.mxu0 0.0
        %731 = vmatpush2.msra.mxu0 0.0
        %732 = vmatprep.subr.mxu0 0.0
        %733 = vmatpush2.msra.mxu0 0.0
        %734 = vmatprep.subr.mxu0 0.0
        %735 = vmatpush2.msra.mxu0 0.0
        %736 = vmatprep.subr.mxu0 0.0
        %737 = vmatpush2.msra.mxu0 0.0
        %738 = vmatprep.subr.mxu0 0.0
        %739 = vmatpush2.msra.mxu0 0.0
        %740 = vmatprep.subr.mxu0 0.0
        %741 = vmatpush2.msra.mxu0 0.0
        %742 = vmatprep.subr.mxu0 0.0
        %743 = vmatpush2.msra.mxu0 0.0
        %744 = vmatprep.subr.mxu0 0.0
        %745 = vmatpush2.msra.mxu0 0.0
        %746 = vmatprep.subr.mxu0 0.0
        %747 = vmatpush2.msra.mxu0 0.0
        %748 = vmatprep.subr.mxu0 0.0
        %749 = vmatpush2.msra.mxu0 0.0
        %750 = vmatprep.subr.mxu0 0.0
        %751 = vmatpush2.msra.mxu0 0.0
        %752 = vmatprep.subr.mxu0 0.0
        %753 = vmatpush2.msra.mxu0 0.0
        %754 = vmatprep.subr.mxu0 0.0
        %755 = vmatpush2.msra.mxu0 0.0
        %756 = vmatprep.subr.mxu0 0.0
        %757 = vmatpush2.msra.mxu0 0.0
        %758 = vmatprep.subr.mxu0 0.0
        %759 = vmatpush2.msra.mxu0 0.0
        %760 = vmatprep.subr.mxu0 0.0
        %761 = vmatpush2.msra.mxu0 0.0
        %762 = vmatprep.mubr.f32.mxu0 0.0
        %763 = vmatmul.mubr.f32.gmra.mxu0 %v696
        %v764 = vpop.f32.mrf.mxu0
        %v765 = vadd.f32 0.0, %v764
        %v766 = vpop.f32.mrf.mxu0
        %767 = vdwg.mxu0
        %v769 = vsel %vm548, %v531, 0
        %771 = vmatprep.subr.mxu0 0.0
        %772 = vmatpush1.msra.mxu0 0.0
        %773 = vmatprep.subr.mxu0 0.0
        %774 = vmatpush1.msra.mxu0 0.0
        %775 = vmatprep.subr.mxu0 0.0
        %776 = vmatpush1.msra.mxu0 0.0
        %777 = vmatprep.subr.mxu0 0.0
        %778 = vmatpush1.msra.mxu0 0.0
        %779 = vmatprep.subr.mxu0 0.0
        %780 = vmatpush1.msra.mxu0 0.0
        %781 = vmatprep.subr.mxu0 0.0
        %782 = vmatpush1.msra.mxu0 0.0
        %783 = vmatprep.subr.mxu0 0.0
        %784 = vmatpush1.msra.mxu0 0.0
        %785 = vmatprep.subr.mxu0 0.0
        %786 = vmatpush1.msra.mxu0 0.0
        %787 = vmatprep.subr.mxu0 0.0
        %788 = vmatpush1.msra.mxu0 0.0
        %789 = vmatprep.subr.mxu0 0.0
        %790 = vmatpush1.msra.mxu0 0.0
        %791 = vmatprep.subr.mxu0 0.0
        %792 = vmatpush1.msra.mxu0 0.0
        %793 = vmatprep.subr.mxu0 0.0
        %794 = vmatpush1.msra.mxu0 0.0
        %795 = vmatprep.subr.mxu0 0.0
        %796 = vmatpush1.msra.mxu0 %v547
        %797 = vmatprep.subr.mxu0 0.0
        %798 = vmatpush1.msra.mxu0 %v546
        %799 = vmatprep.subr.mxu0 0.0
        %800 = vmatpush1.msra.mxu0 %v545
        %801 = vmatprep.subr.mxu0 0.0
        %802 = vmatpush1.msra.mxu0 %v544
        %803 = vmatprep.subr.mxu0 0.0
        %804 = vmatpush2.msra.mxu0 0.0
        %805 = vmatprep.subr.mxu0 0.0
        %806 = vmatpush2.msra.mxu0 0.0
        %807 = vmatprep.subr.mxu0 0.0
        %808 = vmatpush2.msra.mxu0 0.0
        %809 = vmatprep.subr.mxu0 0.0
        %810 = vmatpush2.msra.mxu0 0.0
        %811 = vmatprep.subr.mxu0 0.0
        %812 = vmatpush2.msra.mxu0 0.0
        %813 = vmatprep.subr.mxu0 0.0
        %814 = vmatpush2.msra.mxu0 0.0
        %815 = vmatprep.subr.mxu0 0.0
        %816 = vmatpush2.msra.mxu0 0.0
        %817 = vmatprep.subr.mxu0 0.0
        %818 = vmatpush2.msra.mxu0 0.0
        %819 = vmatprep.subr.mxu0 0.0
        %820 = vmatpush2.msra.mxu0 0.0
        %821 = vmatprep.subr.mxu0 0.0
        %822 = vmatpush2.msra.mxu0 0.0
        %823 = vmatprep.subr.mxu0 0.0
        %824 = vmatpush2.msra.mxu0 0.0
        %825 = vmatprep.subr.mxu0 0.0
        %826 = vmatpush2.msra.mxu0 0.0
        %827 = vmatprep.subr.mxu0 0.0
        %828 = vmatpush2.msra.mxu0 0.0
        %829 = vmatprep.subr.mxu0 0.0
        %830 = vmatpush2.msra.mxu0 0.0
        %831 = vmatprep.subr.mxu0 0.0
        %832 = vmatpush2.msra.mxu0 0.0
        %833 = vmatprep.subr.mxu0 0.0
        %834 = vmatpush2.msra.mxu0 0.0
        %835 = vmatprep.mubr.f32.mxu0 0.0
        %836 = vmatmul.mubr.f32.gmra.mxu0 %v769
        %v837 = vpop.f32.mrf.mxu0
        %v838 = vadd.f32 0.0, %v837
        %v839 = vpop.f32.mrf.mxu0
        %840 = vdwg.mxu0
        %vm841 = vcmp.gt.s32.totalorder %v451, %v449
        %vm842 = vcmp.ge.s32.totalorder %v451, 8
        %vm843 = vmor %vm841, %vm842
        %v844 = vsel %vm843, 1, 0
        %vm845 = vcmp.eq.s32.totalorder %v844, 1
        %v846 = vsel %vm845, -inf, %v619
        %v847 = vsel %vm845, -inf, %v692
        %v848 = vsel %vm845, -inf, %v765
        %v849 = vsel %vm845, -inf, %v838
        %850 = vmax.xlane.f32.xlu0 %v846
        %v851 = vpop.xlane.xlu0 %850
        %852 = vmax.xlane.f32.xlu0 %v847
        %v853 = vpop.xlane.xlu0 %852
        %854 = vmax.xlane.f32.xlu0 %v848
        %v855 = vpop.xlane.xlu0 %854
        %856 = vmax.xlane.f32.xlu0 %v849
        %v857 = vpop.xlane.xlu0 %856
        %v858 = vsub.f32 %v846, %v851
        %v859 = vsub.f32 %v847, %v853
        %v860 = vsub.f32 %v848, %v855
        %v861 = vsub.f32 %v849, %v857
        %v862 = vmul.f32 %v858, 1.442695
        %v863 = vpow.pop %v862
        %v864 = vmul.f32 %v859, 1.442695
        %v865 = vpow.pop %v864
        %v866 = vmul.f32 %v860, 1.442695
        %v867 = vpow.pop %v866
        %v868 = vmul.f32 %v861, 1.442695
        %v869 = vpow.pop %v868
        %870 = vadd.xlane.f32.xlu0 %v863
        %v871 = vpop.xlane.xlu0 %870
        %872 = vadd.xlane.f32.xlu0 %v865
        %v873 = vpop.xlane.xlu0 %872
        %874 = vadd.xlane.f32.xlu0 %v867
        %v875 = vpop.xlane.xlu0 %874
        %876 = vadd.xlane.f32.xlu0 %v869
        %v877 = vpop.xlane.xlu0 %876
        %v878 = vrcp.pop %v871
        %v879 = vmul.f32 1.0, %v878
        %v880 = vrcp.pop %v873
        %v881 = vmul.f32 1.0, %v880
        %v882 = vrcp.pop %v875
        %v883 = vmul.f32 1.0, %v882
        %v884 = vrcp.pop %v877
        %v885 = vmul.f32 1.0, %v884
        %v886 = vmul.f32 %v863, %v879
        %v887 = vmul.f32 %v865, %v881
        %v888 = vmul.f32 %v867, %v883
        %v889 = vmul.f32 %v869, %v885
        %890 = vst [vmem:[%s393] sm:$0xff] %v886
        %891 = vst [vmem:[%s393 + $0x8] sm:$0xff] %v887
        %892 = vst [vmem:[%s393 + $0x10] sm:$0xff] %v888
        %893 = vst [vmem:[%s393 + $0x18] sm:$0xff] %v889
        %v894 = vld [vmem:[%s422] sm:$0xff]
        %v895 = vld [vmem:[%s422 + $0x8] sm:$0xff]
        %v896 = vld [vmem:[%s422 + $0x10] sm:$0xff]
        %v897 = vld [vmem:[%s422 + $0x18] sm:$0xff]
        %v898 = vld [vmem:[%s422 + $0x20] sm:$0xff]
        %v899 = vld [vmem:[%s422 + $0x28] sm:$0xff]
        %v900 = vld [vmem:[%s422 + $0x30] sm:$0xff]
        %v901 = vld [vmem:[%s422 + $0x38] sm:$0xff]
        %v902 = vld [vmem:[%s422 + $0x40] sm:$0xff]
        %v903 = vld [vmem:[%s422 + $0x48] sm:$0xff]
        %v904 = vld [vmem:[%s422 + $0x50] sm:$0xff]
        %v905 = vld [vmem:[%s422 + $0x58] sm:$0xff]
        %v906 = vld [vmem:[%s422 + $0x60] sm:$0xff]
        %v907 = vld [vmem:[%s422 + $0x68] sm:$0xff]
        %v908 = vld [vmem:[%s422 + $0x70] sm:$0xff]
        %v909 = vld [vmem:[%s422 + $0x78] sm:$0xff]
        %v910 = vld [vmem:[%s422 + $0x80] sm:$0xff]
        %v911 = vld [vmem:[%s422 + $0x88] sm:$0xff]
        %v912 = vld [vmem:[%s422 + $0x90] sm:$0xff]
        %v913 = vld [vmem:[%s422 + $0x98] sm:$0xff]
        %v914 = vld [vmem:[%s422 + $0xa0] sm:$0xff]
        %v915 = vld [vmem:[%s422 + $0xa8] sm:$0xff]
        %v916 = vld [vmem:[%s422 + $0xb0] sm:$0xff]
        %v917 = vld [vmem:[%s422 + $0xb8] sm:$0xff]
        %v918 = vld [vmem:[%s422 + $0xc0] sm:$0xff]
        %v919 = vld [vmem:[%s422 + $0xc8] sm:$0xff]
        %v920 = vld [vmem:[%s422 + $0xd0] sm:$0xff]
        %v921 = vld [vmem:[%s422 + $0xd8] sm:$0xff]
        %v922 = vld [vmem:[%s422 + $0xe0] sm:$0xff]
        %v923 = vld [vmem:[%s422 + $0xe8] sm:$0xff]
        %v924 = vld [vmem:[%s422 + $0xf0] sm:$0xff]
        %v925 = vld [vmem:[%s422 + $0xf8] sm:$0xff]
        %v926 = vld [vmem:[%s422 + $0x100] sm:$0xff]
        %v927 = vld [vmem:[%s422 + $0x108] sm:$0xff]
        %v928 = vld [vmem:[%s422 + $0x110] sm:$0xff]
        %v929 = vld [vmem:[%s422 + $0x118] sm:$0xff]
        %v930 = vld [vmem:[%s422 + $0x120] sm:$0xff]
        %v931 = vld [vmem:[%s422 + $0x128] sm:$0xff]
        %v932 = vld [vmem:[%s422 + $0x130] sm:$0xff]
        %v933 = vld [vmem:[%s422 + $0x138] sm:$0xff]
        %v934 = vld [vmem:[%s422 + $0x140] sm:$0xff]
        %v935 = vld [vmem:[%s422 + $0x148] sm:$0xff]
        %v936 = vld [vmem:[%s422 + $0x150] sm:$0xff]
        %v937 = vld [vmem:[%s422 + $0x158] sm:$0xff]
        %v938 = vld [vmem:[%s422 + $0x160] sm:$0xff]
        %v939 = vld [vmem:[%s422 + $0x168] sm:$0xff]
        %v940 = vld [vmem:[%s422 + $0x170] sm:$0xff]
        %v941 = vld [vmem:[%s422 + $0x178] sm:$0xff]
        %v942 = vld [vmem:[%s422 + $0x180] sm:$0xff]
        %v943 = vld [vmem:[%s422 + $0x188] sm:$0xff]
        %v944 = vld [vmem:[%s422 + $0x190] sm:$0xff]
        %v945 = vld [vmem:[%s422 + $0x198] sm:$0xff]
        %v946 = vld [vmem:[%s422 + $0x1a0] sm:$0xff]
        %v947 = vld [vmem:[%s422 + $0x1a8] sm:$0xff]
        %v948 = vld [vmem:[%s422 + $0x1b0] sm:$0xff]
        %v949 = vld [vmem:[%s422 + $0x1b8] sm:$0xff]
        %v950 = vld [vmem:[%s422 + $0x1c0] sm:$0xff]
        %v951 = vld [vmem:[%s422 + $0x1c8] sm:$0xff]
        %v952 = vld [vmem:[%s422 + $0x1d0] sm:$0xff]
        %v953 = vld [vmem:[%s422 + $0x1d8] sm:$0xff]
        %v954 = vld [vmem:[%s422 + $0x1e0] sm:$0xff]
        %v955 = vld [vmem:[%s422 + $0x1e8] sm:$0xff]
        %v956 = vld [vmem:[%s422 + $0x1f0] sm:$0xff]
        %v957 = vld [vmem:[%s422 + $0x1f8] sm:$0xff]
        %958 = vmatprep.subr.mxu0 0.0
        %959 = vmatpush1.msra.mxu0 %v909
        %960 = vmatprep.subr.mxu0 0.0
        %961 = vmatpush1.msra.mxu0 %v908
        %962 = vmatprep.subr.mxu0 0.0
        %963 = vmatpush1.msra.mxu0 %v907
        %964 = vmatprep.subr.mxu0 0.0
        %965 = vmatpush1.msra.mxu0 %v906
        %966 = vmatprep.subr.mxu0 0.0
        %967 = vmatpush1.msra.mxu0 %v905
        %968 = vmatprep.subr.mxu0 0.0
        %969 = vmatpush1.msra.mxu0 %v904
        %970 = vmatprep.subr.mxu0 0.0
        %971 = vmatpush1.msra.mxu0 %v903
        %972 = vmatprep.subr.mxu0 0.0
        %973 = vmatpush1.msra.mxu0 %v902
        %974 = vmatprep.subr.mxu0 0.0
        %975 = vmatpush1.msra.mxu0 %v901
        %976 = vmatprep.subr.mxu0 0.0
        %977 = vmatpush1.msra.mxu0 %v900
        %978 = vmatprep.subr.mxu0 0.0
        %979 = vmatpush1.msra.mxu0 %v899
        %980 = vmatprep.subr.mxu0 0.0
        %981 = vmatpush1.msra.mxu0 %v898
        %982 = vmatprep.subr.mxu0 0.0
        %983 = vmatpush1.msra.mxu0 %v897
        %984 = vmatprep.subr.mxu0 0.0
        %985 = vmatpush1.msra.mxu0 %v896
        %986 = vmatprep.subr.mxu0 0.0
        %987 = vmatpush1.msra.mxu0 %v895
        %988 = vmatprep.subr.mxu0 0.0
        %989 = vmatpush1.msra.mxu0 %v894
        %990 = vmatprep.subr.mxu0 0.0
        %991 = vmatpush2.msra.mxu0 0.0
        %992 = vmatprep.subr.mxu0 0.0
        %993 = vmatpush2.msra.mxu0 0.0
        %994 = vmatprep.subr.mxu0 0.0
        %995 = vmatpush2.msra.mxu0 0.0
        %996 = vmatprep.subr.mxu0 0.0
        %997 = vmatpush2.msra.mxu0 0.0
        %998 = vmatprep.subr.mxu0 0.0
        %999 = vmatpush2.msra.mxu0 0.0
        %1000 = vmatprep.subr.mxu0 0.0
        %1001 = vmatpush2.msra.mxu0 0.0
        %1002 = vmatprep.subr.mxu0 0.0
        %1003 = vmatpush2.msra.mxu0 0.0
        %1004 = vmatprep.subr.mxu0 0.0
        %1005 = vmatpush2.msra.mxu0 0.0
        %1006 = vmatprep.subr.mxu0 0.0
        %1007 = vmatpush2.msra.mxu0 0.0
        %1008 = vmatprep.subr.mxu0 0.0
        %1009 = vmatpush2.msra.mxu0 0.0
        %1010 = vmatprep.subr.mxu0 0.0
        %1011 = vmatpush2.msra.mxu0 0.0
        %1012 = vmatprep.subr.mxu0 0.0
        %1013 = vmatpush2.msra.mxu0 0.0
        %1014 = vmatprep.subr.mxu0 0.0
        %1015 = vmatpush2.msra.mxu0 0.0
        %1016 = vmatprep.subr.mxu0 0.0
        %1017 = vmatpush2.msra.mxu0 0.0
        %1018 = vmatprep.subr.mxu0 0.0
        %1019 = vmatpush2.msra.mxu0 0.0
        %1020 = vmatprep.subr.mxu0 0.0
        %1021 = vmatpush2.msra.mxu0 0.0
        %1022 = vmatprep.mubr.f32.mxu0 0.0
        %1023 = vmatmul.mubr.f32.gmra.mxu0 %v886
        %v1024 = vpop.f32.mrf.mxu0
        %v1025 = vadd.f32 0.0, %v1024
        %v1026 = vpop.f32.mrf.mxu0
        %1027 = vdwg.mxu0
        %1028 = vmatprep.subr.mxu0 0.0
        %1029 = vmatpush1.msra.mxu0 %v925
        %1030 = vmatprep.subr.mxu0 0.0
        %1031 = vmatpush1.msra.mxu0 %v924
        %1032 = vmatprep.subr.mxu0 0.0
        %1033 = vmatpush1.msra.mxu0 %v923
        %1034 = vmatprep.subr.mxu0 0.0
        %1035 = vmatpush1.msra.mxu0 %v922
        %1036 = vmatprep.subr.mxu0 0.0
        %1037 = vmatpush1.msra.mxu0 %v921
        %1038 = vmatprep.subr.mxu0 0.0
        %1039 = vmatpush1.msra.mxu0 %v920
        %1040 = vmatprep.subr.mxu0 0.0
        %1041 = vmatpush1.msra.mxu0 %v919
        %1042 = vmatprep.subr.mxu0 0.0
        %1043 = vmatpush1.msra.mxu0 %v918
        %1044 = vmatprep.subr.mxu0 0.0
        %1045 = vmatpush1.msra.mxu0 %v917
        %1046 = vmatprep.subr.mxu0 0.0
        %1047 = vmatpush1.msra.mxu0 %v916
        %1048 = vmatprep.subr.mxu0 0.0
        %1049 = vmatpush1.msra.mxu0 %v915
        %1050 = vmatprep.subr.mxu0 0.0
        %1051 = vmatpush1.msra.mxu0 %v914
        %1052 = vmatprep.subr.mxu0 0.0
        %1053 = vmatpush1.msra.mxu0 %v913
        %1054 = vmatprep.subr.mxu0 0.0
        %1055 = vmatpush1.msra.mxu0 %v912
        %1056 = vmatprep.subr.mxu0 0.0
        %1057 = vmatpush1.msra.mxu0 %v911
        %1058 = vmatprep.subr.mxu0 0.0
        %1059 = vmatpush1.msra.mxu0 %v910
        %1060 = vmatprep.subr.mxu0 0.0
        %1061 = vmatpush2.msra.mxu0 0.0
        %1062 = vmatprep.subr.mxu0 0.0
        %1063 = vmatpush2.msra.mxu0 0.0
        %1064 = vmatprep.subr.mxu0 0.0
        %1065 = vmatpush2.msra.mxu0 0.0
        %1066 = vmatprep.subr.mxu0 0.0
        %1067 = vmatpush2.msra.mxu0 0.0
        %1068 = vmatprep.subr.mxu0 0.0
        %1069 = vmatpush2.msra.mxu0 0.0
        %1070 = vmatprep.subr.mxu0 0.0
        %1071 = vmatpush2.msra.mxu0 0.0
        %1072 = vmatprep.subr.mxu0 0.0
        %1073 = vmatpush2.msra.mxu0 0.0
        %1074 = vmatprep.subr.mxu0 0.0
        %1075 = vmatpush2.msra.mxu0 0.0
        %1076 = vmatprep.subr.mxu0 0.0
        %1077 = vmatpush2.msra.mxu0 0.0
        %1078 = vmatprep.subr.mxu0 0.0
        %1079 = vmatpush2.msra.mxu0 0.0
        %1080 = vmatprep.subr.mxu0 0.0
        %1081 = vmatpush2.msra.mxu0 0.0
        %1082 = vmatprep.subr.mxu0 0.0
        %1083 = vmatpush2.msra.mxu0 0.0
        %1084 = vmatprep.subr.mxu0 0.0
        %1085 = vmatpush2.msra.mxu0 0.0
        %1086 = vmatprep.subr.mxu0 0.0
        %1087 = vmatpush2.msra.mxu0 0.0
        %1088 = vmatprep.subr.mxu0 0.0
        %1089 = vmatpush2.msra.mxu0 0.0
        %1090 = vmatprep.subr.mxu0 0.0
        %1091 = vmatpush2.msra.mxu0 0.0
        %1092 = vmatprep.mubr.f32.mxu0 0.0
        %1093 = vmatmul.mubr.f32.gmra.mxu0 %v887
        %v1094 = vpop.f32.mrf.mxu0
        %v1095 = vadd.f32 0.0, %v1094
        %v1096 = vpop.f32.mrf.mxu0
        %1097 = vdwg.mxu0
        %1098 = vmatprep.subr.mxu0 0.0
        %1099 = vmatpush1.msra.mxu0 %v941
        %1100 = vmatprep.subr.mxu0 0.0
        %1101 = vmatpush1.msra.mxu0 %v940
        %1102 = vmatprep.subr.mxu0 0.0
        %1103 = vmatpush1.msra.mxu0 %v939
        %1104 = vmatprep.subr.mxu0 0.0
        %1105 = vmatpush1.msra.mxu0 %v938
        %1106 = vmatprep.subr.mxu0 0.0
        %1107 = vmatpush1.msra.mxu0 %v937
        %1108 = vmatprep.subr.mxu0 0.0
        %1109 = vmatpush1.msra.mxu0 %v936
        %1110 = vmatprep.subr.mxu0 0.0
        %1111 = vmatpush1.msra.mxu0 %v935
        %1112 = vmatprep.subr.mxu0 0.0
        %1113 = vmatpush1.msra.mxu0 %v934
        %1114 = vmatprep.subr.mxu0 0.0
        %1115 = vmatpush1.msra.mxu0 %v933
        %1116 = vmatprep.subr.mxu0 0.0
        %1117 = vmatpush1.msra.mxu0 %v932
        %1118 = vmatprep.subr.mxu0 0.0
        %1119 = vmatpush1.msra.mxu0 %v931
        %1120 = vmatprep.subr.mxu0 0.0
        %1121 = vmatpush1.msra.mxu0 %v930
        %1122 = vmatprep.subr.mxu0 0.0
        %1123 = vmatpush1.msra.mxu0 %v929
        %1124 = vmatprep.subr.mxu0 0.0
        %1125 = vmatpush1.msra.mxu0 %v928
        %1126 = vmatprep.subr.mxu0 0.0
        %1127 = vmatpush1.msra.mxu0 %v927
        %1128 = vmatprep.subr.mxu0 0.0
        %1129 = vmatpush1.msra.mxu0 %v926
        %1130 = vmatprep.subr.mxu0 0.0
        %1131 = vmatpush2.msra.mxu0 0.0
        %1132 = vmatprep.subr.mxu0 0.0
        %1133 = vmatpush2.msra.mxu0 0.0
        %1134 = vmatprep.subr.mxu0 0.0
        %1135 = vmatpush2.msra.mxu0 0.0
        %1136 = vmatprep.subr.mxu0 0.0
        %1137 = vmatpush2.msra.mxu0 0.0
        %1138 = vmatprep.subr.mxu0 0.0
        %1139 = vmatpush2.msra.mxu0 0.0
        %1140 = vmatprep.subr.mxu0 0.0
        %1141 = vmatpush2.msra.mxu0 0.0
        %1142 = vmatprep.subr.mxu0 0.0
        %1143 = vmatpush2.msra.mxu0 0.0
        %1144 = vmatprep.subr.mxu0 0.0
        %1145 = vmatpush2.msra.mxu0 0.0
        %1146 = vmatprep.subr.mxu0 0.0
        %1147 = vmatpush2.msra.mxu0 0.0
        %1148 = vmatprep.subr.mxu0 0.0
        %1149 = vmatpush2.msra.mxu0 0.0
        %1150 = vmatprep.subr.mxu0 0.0
        %1151 = vmatpush2.msra.mxu0 0.0
        %1152 = vmatprep.subr.mxu0 0.0
        %1153 = vmatpush2.msra.mxu0 0.0
        %1154 = vmatprep.subr.mxu0 0.0
        %1155 = vmatpush2.msra.mxu0 0.0
        %1156 = vmatprep.subr.mxu0 0.0
        %1157 = vmatpush2.msra.mxu0 0.0
        %1158 = vmatprep.subr.mxu0 0.0
        %1159 = vmatpush2.msra.mxu0 0.0
        %1160 = vmatprep.subr.mxu0 0.0
        %1161 = vmatpush2.msra.mxu0 0.0
        %1162 = vmatprep.mubr.f32.mxu0 0.0
        %1163 = vmatmul.mubr.f32.gmra.mxu0 %v888
        %v1164 = vpop.f32.mrf.mxu0
        %v1165 = vadd.f32 0.0, %v1164
        %v1166 = vpop.f32.mrf.mxu0
        %1167 = vdwg.mxu0
        %1168 = vmatprep.subr.mxu0 0.0
        %1169 = vmatpush1.msra.mxu0 %v957
        %1170 = vmatprep.subr.mxu0 0.0
        %1171 = vmatpush1.msra.mxu0 %v956
        %1172 = vmatprep.subr.mxu0 0.0
        %1173 = vmatpush1.msra.mxu0 %v955
        %1174 = vmatprep.subr.mxu0 0.0
        %1175 = vmatpush1.msra.mxu0 %v954
        %1176 = vmatprep.subr.mxu0 0.0
        %1177 = vmatpush1.msra.mxu0 %v953
        %1178 = vmatprep.subr.mxu0 0.0
        %1179 = vmatpush1.msra.mxu0 %v952
        %1180 = vmatprep.subr.mxu0 0.0
        %1181 = vmatpush1.msra.mxu0 %v951
        %1182 = vmatprep.subr.mxu0 0.0
        %1183 = vmatpush1.msra.mxu0 %v950
        %1184 = vmatprep.subr.mxu0 0.0
        %1185 = vmatpush1.msra.mxu0 %v949
        %1186 = vmatprep.subr.mxu0 0.0
        %1187 = vmatpush1.msra.mxu0 %v948
        %1188 = vmatprep.subr.mxu0 0.0
        %1189 = vmatpush1.msra.mxu0 %v947
        %1190 = vmatprep.subr.mxu0 0.0
        %1191 = vmatpush1.msra.mxu0 %v946
        %1192 = vmatprep.subr.mxu0 0.0
        %1193 = vmatpush1.msra.mxu0 %v945
        %1194 = vmatprep.subr.mxu0 0.0
        %1195 = vmatpush1.msra.mxu0 %v944
        %1196 = vmatprep.subr.mxu0 0.0
        %1197 = vmatpush1.msra.mxu0 %v943
        %1198 = vmatprep.subr.mxu0 0.0
        %1199 = vmatpush1.msra.mxu0 %v942
        %1200 = vmatprep.subr.mxu0 0.0
        %1201 = vmatpush2.msra.mxu0 0.0
        %1202 = vmatprep.subr.mxu0 0.0
        %1203 = vmatpush2.msra.mxu0 0.0
        %1204 = vmatprep.subr.mxu0 0.0
        %1205 = vmatpush2.msra.mxu0 0.0
        %1206 = vmatprep.subr.mxu0 0.0
        %1207 = vmatpush2.msra.mxu0 0.0
        %1208 = vmatprep.subr.mxu0 0.0
        %1209 = vmatpush2.msra.mxu0 0.0
        %1210 = vmatprep.subr.mxu0 0.0
        %1211 = vmatpush2.msra.mxu0 0.0
        %1212 = vmatprep.subr.mxu0 0.0
        %1213 = vmatpush2.msra.mxu0 0.0
        %1214 = vmatprep.subr.mxu0 0.0
        %1215 = vmatpush2.msra.mxu0 0.0
        %1216 = vmatprep.subr.mxu0 0.0
        %1217 = vmatpush2.msra.mxu0 0.0
        %1218 = vmatprep.subr.mxu0 0.0
        %1219 = vmatpush2.msra.mxu0 0.0
        %1220 = vmatprep.subr.mxu0 0.0
        %1221 = vmatpush2.msra.mxu0 0.0
        %1222 = vmatprep.subr.mxu0 0.0
        %1223 = vmatpush2.msra.mxu0 0.0
        %1224 = vmatprep.subr.mxu0 0.0
        %1225 = vmatpush2.msra.mxu0 0.0
        %1226 = vmatprep.subr.mxu0 0.0
        %1227 = vmatpush2.msra.mxu0 0.0
        %1228 = vmatprep.subr.mxu0 0.0
        %1229 = vmatpush2.msra.mxu0 0.0
        %1230 = vmatprep.subr.mxu0 0.0
        %1231 = vmatpush2.msra.mxu0 0.0
        %1232 = vmatprep.mubr.f32.mxu0 0.0
        %1233 = vmatmul.mubr.f32.gmra.mxu0 %v889
        %v1234 = vpop.f32.mrf.mxu0
        %v1235 = vadd.f32 0.0, %v1234
        %v1236 = vpop.f32.mrf.mxu0
        %1237 = vdwg.mxu0
        %1238 = vst.msk [vmem:[%s386] sm:$0xff] %vm548, %v1025
        %1239 = vst.msk [vmem:[%s386 + $0x8] sm:$0xff] %vm548, %v1095
        %1240 = vst.msk [vmem:[%s386 + $0x10] sm:$0xff] %vm548, %v1165
        %1241 = vst.msk [vmem:[%s386 + $0x18] sm:$0xff] %vm548, %v1235
        %s1242 = sand.u32 %s183, 1
        %s1243 = scalar_lea.sflag [#allocation3], %s1242
        %s1244 = sand.u32 %s183, 1
        %s1245 = smul.addr %s1244, 32
        %s1246 = scalar_lea.vmem [#allocation2], %s1245
        %s1247 = sand.u32 %s25, 1
        %s1248 = scalar_lea.sflag [#allocation5], %s1247
        %s1249 = sand.u32 %s211, 1
        %s1250 = smul.addr %s1249, 32
        %s1251 = scalar_lea.vmem [#allocation4], %s1250
        %s1252 = sand.u32 %s25, 1
        %s1253 = scalar_lea.sflag [#allocation5], %s1252
        %s1254 = sand.u32 %s239, 1
        %s1255 = smul.addr %s1254, 32
        %s1256 = scalar_lea.vmem [#allocation6], %s1255
        // Predicated region
        $region41: #{tpu_custom_call.1} parent=39 // pred_check
          %p1257 = pneg %p193
        $region42: #{tpu_custom_call.1} parent=39 // pred_check_branch
          %1259 = sbr.rel (%p1257) target = $region44
        $region43: #{tpu_custom_call.1} parent=39 // pred_region
          %s1260 = smul.u32 4, %s29
          %s1262 = ssub.s32 512, 512
          %1263 = vsyncadd %s1243, %s1262
          %s1264 = sadd.s32 %s30, %s1260
          %s1265 = smul.addr %s1264, 128
          %s1266 = scalar_lea.hbm %s5, %s1265
          %s1267 = sshll.u32 %s1246, 4
          %s1268 = int_to_ptr.vmem [resolvable:$true] %s1267
          %1273 = dma.vmem_to_hbm [thread:$0]  %s1268, 512, %s1266, %s1243, 128, 128, 8
        $region44: #{tpu_custom_call.1} parent=39 // pred_fallthru
          _
        // Predicated region
        $region45: #{tpu_custom_call.1} parent=39 // pred_check
          %p1274 = pneg %p221
        $region46: #{tpu_custom_call.1} parent=39 // pred_check_branch
          %1276 = sbr.rel (%p1274) target = $region48
        $region47: #{tpu_custom_call.1} parent=39 // pred_region
          %s1277 = smul.u32 4, %s29
          %s1279 = ssub.s32 512, 512
          %1280 = vsyncadd %s1248, %s1279
          %s1281 = sadd.s32 %s30, %s1277
          %s1282 = smul.addr %s1281, 128
          %s1283 = scalar_lea.hbm %s6, %s1282
          %s1284 = sshll.u32 %s1251, 4
          %s1285 = int_to_ptr.vmem [resolvable:$true] %s1284
          %1290 = dma.vmem_to_hbm [thread:$0]  %s1285, 512, %s1283, %s1248, 128, 128, 8
        $region48: #{tpu_custom_call.1} parent=39 // pred_fallthru
          _
        // Predicated region
        $region49: #{tpu_custom_call.1} parent=39 // pred_check
          %p1291 = pneg %p249
        $region50: #{tpu_custom_call.1} parent=39 // pred_check_branch
          %1293 = sbr.rel (%p1291) target = $region52
        $region51: #{tpu_custom_call.1} parent=39 // pred_region
          %s1294 = smul.u32 4, %s29
          %s1296 = ssub.s32 512, 512
          %1297 = vsyncadd %s1253, %s1296
          %s1298 = sadd.s32 %s30, %s1294
          %s1299 = smul.addr %s1298, 128
          %s1300 = scalar_lea.hbm %s7, %s1299
          %s1301 = sshll.u32 %s1256, 4
          %s1302 = int_to_ptr.vmem [resolvable:$true] %s1301
          %1307 = dma.vmem_to_hbm [thread:$0]  %s1302, 512, %s1300, %s1253, 128, 128, 8
        $region52: #{tpu_custom_call.1} parent=39 // pred_fallthru
          _
      $region40: #{tpu_custom_call.1} parent=5 // pred_fallthru
        _
      %p1308 = scmp.le.s32.totalorder 2, %s20
      // Predicated region
      $region53: #{tpu_custom_call.1} parent=5 // pred_check
        %p1309 = pneg %p1308
      $region54: #{tpu_custom_call.1} parent=5 // pred_check_branch
        %1311 = sbr.rel (%p1309) target = $region56
      $region55: #{tpu_custom_call.1} parent=5 // pred_region
        %s1312 = ssub.s32 %s20, 2
        // Predicated region
        $region57: #{tpu_custom_call.1} parent=55 // pred_check
          %p1313 = pneg %p199
        $region58: #{tpu_custom_call.1} parent=55 // pred_check_branch
          %1315 = sbr.rel (%p1313) target = $region60
        $region59: #{tpu_custom_call.1} parent=55 // pred_region
          %s1316 = sand.u32 %s184, 1
          %s1317 = scalar_lea.sflag [#allocation3], %s1316
          %s1318 = sand.u32 %s184, 1
          %s1319 = smul.addr %s1318, 32
          %s1320 = scalar_lea.vmem [#allocation2], %s1319
          %1321 = dma.done %s1317, 512
        $region60: #{tpu_custom_call.1} parent=55 // pred_fallthru
          _
        // Predicated region
        $region61: #{tpu_custom_call.1} parent=55 // pred_check
          %p1322 = pneg %p227
        $region62: #{tpu_custom_call.1} parent=55 // pred_check_branch
          %1324 = sbr.rel (%p1322) target = $region64
        $region63: #{tpu_custom_call.1} parent=55 // pred_region
          %s1325 = sand.u32 %s26, 1
          %s1326 = scalar_lea.sflag [#allocation5], %s1325
          %s1327 = sand.u32 %s212, 1
          %s1328 = smul.addr %s1327, 32
          %s1329 = scalar_lea.vmem [#allocation4], %s1328
          %1330 = dma.done %s1326, 512
        $region64: #{tpu_custom_call.1} parent=55 // pred_fallthru
          _
        // Predicated region
        $region65: #{tpu_custom_call.1} parent=55 // pred_check
          %p1331 = pneg %p255
        $region66: #{tpu_custom_call.1} parent=55 // pred_check_branch
          %1333 = sbr.rel (%p1331) target = $region68
        $region67: #{tpu_custom_call.1} parent=55 // pred_region
          %s1334 = sand.u32 %s26, 1
          %s1335 = scalar_lea.sflag [#allocation5], %s1334
          %s1336 = sand.u32 %s240, 1
          %s1337 = smul.addr %s1336, 32
          %s1338 = scalar_lea.vmem [#allocation6], %s1337
          %1339 = dma.done %s1335, 512
        $region68: #{tpu_custom_call.1} parent=55 // pred_fallthru
          _
      $region56: #{tpu_custom_call.1} parent=5 // pred_fallthru
        _
    $region6: #{tpu_custom_call.1} parent=1 // loop_footer
      %s24 = sadd.s32 1, %s20
    $region7: #{tpu_custom_call.1} parent=1 // loop_footer_branch
      %19 = sbr.rel target = $region3
    $region8: #{tpu_custom_call.1} parent=1 // loop_exit
      _
    %1340 = vsyncpa [#allocation3], 1
    %s1341 = scalar_lea.sflag [#allocation3], 1
    %1342 = vsyncpa %s1341, 1
    %1343 = vsyncpa [#allocation5], 1
    %s1344 = scalar_lea.sflag [#allocation5], 1
    %1345 = vsyncpa %s1344, 1

</llo_original>
